<compile_context>
chip_gen: v7x
topology: tpu7x:2x2x1
jax: 0.10.0
libtpu: 0.0.40
codegen_flags: <defaults>
</compile_context>

<pallas_src>
import math

import jax
import jax.numpy as jnp
from jax import lax
from jax.experimental import pallas as pl
from jax.experimental.pallas import tpu as pltpu

# Small, module-consistent hyperparameters (scaled down from d_model=768/12 heads).
D_MODEL = 128
N_HEADS = 4
D_K = 32
D_V = 32
SEQ = 16
BATCH = 2
LN_EPS = 1e-5
MASK_FILL = -1.0e9


def mha_kernel(q_ref, k_ref, v_ref, mask_ref,
               wq_ref, bq_ref, wk_ref, bk_ref, wv_ref, bv_ref,
               wo_ref, bo_ref, gamma_ref, beta_ref,
               out_ref):
    # Current batch element's tiles (block index 0 squeezes the size-1 batch dim).
    q_in = q_ref[0]          # (S, D_MODEL)
    k_in = k_ref[0]          # (S, D_MODEL)
    v_in = v_ref[0]          # (S, D_MODEL)

    # Additive mask bias, computed ONCE (hoisted out of the head loop; JAX does
    # not CSE the select/broadcast if it is left inside the unrolled loop).
    bias = jnp.where(mask_ref[0] > 0.5, MASK_FILL, 0.0)       # (S, S)

    # Packed QKV projections: one (S, D) @ (D, H*D_K) MXU matmul each.
    q_s = jnp.dot(q_in, wq_ref[...], preferred_element_type=jnp.float32) + bq_ref[...]
    k_s = jnp.dot(k_in, wk_ref[...], preferred_element_type=jnp.float32) + bk_ref[...]
    v_s = jnp.dot(v_in, wv_ref[...], preferred_element_type=jnp.float32) + bv_ref[...]

    # Fold 1/sqrt(d_k) into q_s once instead of scaling scores per head.
    q_s = q_s * (1.0 / math.sqrt(D_K))

    # Accumulate the output projection per head (no lane-axis concat). Each
    # partial (S, D_V) @ (D_V, D_MODEL) matmul is lane-dense (128 wide).
    # Seed the accumulator with residual + output-projection bias.
    acc = q_in + bo_ref[...]                                  # (S, D_MODEL)

    # Static unrolled per-head loop (N_HEADS is small).
    # TODO(synk): at real BERT sizes (S>=512, d_model=768) batch the heads into
    # one 3-D dot_general and tile the key axis flash-style instead of
    # materializing full (S, S) scores per head.
    for h in range(N_HEADS):
        q_h = q_s[:, h * D_K:(h + 1) * D_K]                   # (S, D_K)
        k_h = k_s[:, h * D_K:(h + 1) * D_K]                   # (S, D_K)
        v_h = v_s[:, h * D_V:(h + 1) * D_V]                   # (S, D_V)

        # Contract on the feature axis directly -> no explicit transpose.
        scores = lax.dot_general(
            q_h, k_h, (((1,), (1,)), ((), ())),
            preferred_element_type=jnp.float32) + bias        # (S, S)

        # Numerically-stable softmax; normalization divide goes to the EUP slot.
        m = jnp.max(scores, axis=-1, keepdims=True)
        p = jnp.exp(scores - m)
        attn = p * pl.reciprocal(jnp.sum(p, axis=-1, keepdims=True), approx=True)

        ctx_h = jnp.dot(attn, v_h, preferred_element_type=jnp.float32)   # (S, D_V)
        acc = acc + jnp.dot(ctx_h, wo_ref[h * D_V:(h + 1) * D_V, :],
                            preferred_element_type=jnp.float32)

    # LayerNorm over the feature (last) axis; biased variance like torch.
    mean = jnp.mean(acc, axis=-1, keepdims=True)
    var = jnp.mean((acc - mean) ** 2, axis=-1, keepdims=True)
    normed = (acc - mean) * lax.rsqrt(var + LN_EPS)
    out_ref[0] = normed * gamma_ref[...] + beta_ref[...]


def multi_head_attention(Q, K, V, attn_mask, params):
    """Q, K, V: (B, S, D_MODEL) f32; attn_mask: (B, S, S) f32 (1.0 == masked)."""
    B, S, D = Q.shape
    Hd_k = N_HEADS * D_K
    Hd_v = N_HEADS * D_V

    batch_map = lambda b: (b, 0, 0)
    const_map = lambda b: (0, 0)

    # Weights/biases use a constant index_map (grid-invariant). At these toy
    # sizes double-buffering them is negligible; at d_model=768 on v7x (64 MiB
    # VMEM) they should be single-buffered (pipeline_mode) before scaling up.
    in_specs = [
        pl.BlockSpec((1, S, D), batch_map),      # Q
        pl.BlockSpec((1, S, D), batch_map),      # K
        pl.BlockSpec((1, S, D), batch_map),      # V
        pl.BlockSpec((1, S, S), batch_map),      # attn_mask (kept general, matches torch API)
        pl.BlockSpec((D, Hd_k), const_map),      # W_Q
        pl.BlockSpec((1, Hd_k), const_map),      # b_Q
        pl.BlockSpec((D, Hd_k), const_map),      # W_K
        pl.BlockSpec((1, Hd_k), const_map),      # b_K
        pl.BlockSpec((D, Hd_v), const_map),      # W_V
        pl.BlockSpec((1, Hd_v), const_map),      # b_V
        pl.BlockSpec((Hd_v, D), const_map),      # W_O
        pl.BlockSpec((1, D), const_map),         # b_O
        pl.BlockSpec((1, D), const_map),         # ln gamma
        pl.BlockSpec((1, D), const_map),         # ln beta
    ]
    out_specs = pl.BlockSpec((1, S, D), batch_map)

    return pl.pallas_call(
        mha_kernel,
        out_shape=jax.ShapeDtypeStruct((B, S, D), jnp.float32),
        grid_spec=pltpu.PrefetchScalarGridSpec(
            num_scalar_prefetch=0,
            grid=(B,),
            in_specs=in_specs,
            out_specs=out_specs,
        ),
        compiler_params=pltpu.CompilerParams(dimension_semantics=("parallel",)),
    )(Q, K, V, attn_mask, *params)


def reference_mha(Q, K, V, attn_mask, params):
    """Pure-JAX reference matching the PyTorch forward semantics."""
    wq, bq, wk, bk, wv, bv, wo, bo, gamma, beta = params
    B, S, D = Q.shape
    q_s = (Q @ wq + bq).reshape(B, S, N_HEADS, D_K).transpose(0, 2, 1, 3)
    k_s = (K @ wk + bk).reshape(B, S, N_HEADS, D_K).transpose(0, 2, 1, 3)
    v_s = (V @ wv + bv).reshape(B, S, N_HEADS, D_V).transpose(0, 2, 1, 3)
    scores = jnp.einsum('bhqd,bhkd->bhqk', q_s, k_s) / math.sqrt(D_K)
    scores = jnp.where(attn_mask[:, None, :, :] > 0.5, MASK_FILL, scores)
    attn = jax.nn.softmax(scores, axis=-1)
    ctx = jnp.einsum('bhqk,bhkd->bhqd', attn, v_s)
    ctx = ctx.transpose(0, 2, 1, 3).reshape(B, S, N_HEADS * D_V)
    out = ctx @ wo + bo + Q
    mean = jnp.mean(out, axis=-1, keepdims=True)
    var = jnp.mean((out - mean) ** 2, axis=-1, keepdims=True)
    return (out - mean) * jax.lax.rsqrt(var + LN_EPS) * gamma + beta


def make_params(key):
    ks = jax.random.split(key, 8)
    Hd_k = N_HEADS * D_K
    Hd_v = N_HEADS * D_V
    s = 0.02
    wq = jax.random.normal(ks[0], (D_MODEL, Hd_k), jnp.float32) * s
    bq = jax.random.normal(ks[1], (1, Hd_k), jnp.float32) * s
    wk = jax.random.normal(ks[2], (D_MODEL, Hd_k), jnp.float32) * s
    bk = jax.random.normal(ks[3], (1, Hd_k), jnp.float32) * s
    wv = jax.random.normal(ks[4], (D_MODEL, Hd_v), jnp.float32) * s
    bv = jax.random.normal(ks[5], (1, Hd_v), jnp.float32) * s
    wo = jax.random.normal(ks[6], (Hd_v, D_MODEL), jnp.float32) * s
    bo = jax.random.normal(ks[7], (1, D_MODEL), jnp.float32) * s
    gamma = jnp.ones((1, D_MODEL), jnp.float32)   # LayerNorm default init
    beta = jnp.zeros((1, D_MODEL), jnp.float32)
    return (wq, bq, wk, bk, wv, bv, wo, bo, gamma, beta)


if __name__ == "__main__":
    key = jax.random.PRNGKey(0)
    kq, kk, kv, kp = jax.random.split(key, 4)

    Q = jax.random.normal(kq, (BATCH, SEQ, D_MODEL), jnp.float32)
    K = jax.random.normal(kk, (BATCH, SEQ, D_MODEL), jnp.float32)
    V = jax.random.normal(kv, (BATCH, SEQ, D_MODEL), jnp.float32)

    # Padding-style mask: mask out the last 3 key positions (1.0 == masked).
    key_valid = (jnp.arange(SEQ) < SEQ - 3).astype(jnp.float32)     # (S,)
    attn_mask = jnp.broadcast_to(1.0 - key_valid[None, None, :], (BATCH, SEQ, SEQ))

    params = make_params(kp)

    out = multi_head_attention(Q, K, V, attn_mask, params)
    out = jax.block_until_ready(out)

    ref = reference_mha(Q, K, V, attn_mask, params)
    assert out.shape == (BATCH, SEQ, D_MODEL)
    # Slightly relaxed tolerance: kernel uses the approximate EUP reciprocal
    # for the softmax normalization.
    assert jnp.allclose(out, ref, atol=1e-3, rtol=1e-3), "mismatch vs reference"

    print("KERNEL_OK")
</pallas_src>

<mosaic_0001>
module attributes {stable_mosaic.version = 11 : i64} {
  func.func @mha_kernel(%arg0: i32, %arg1: memref<1x16x128xf32, #tpu.memory_space<vmem>>, %arg2: memref<1x16x128xf32, #tpu.memory_space<vmem>>, %arg3: memref<1x16x128xf32, #tpu.memory_space<vmem>>, %arg4: memref<1x16x16xf32, #tpu.memory_space<vmem>>, %arg5: memref<128x128xf32, #tpu.memory_space<vmem>>, %arg6: memref<1x128xf32, #tpu.memory_space<vmem>>, %arg7: memref<128x128xf32, #tpu.memory_space<vmem>>, %arg8: memref<1x128xf32, #tpu.memory_space<vmem>>, %arg9: memref<128x128xf32, #tpu.memory_space<vmem>>, %arg10: memref<1x128xf32, #tpu.memory_space<vmem>>, %arg11: memref<128x128xf32, #tpu.memory_space<vmem>>, %arg12: memref<1x128xf32, #tpu.memory_space<vmem>>, %arg13: memref<1x128xf32, #tpu.memory_space<vmem>>, %arg14: memref<1x128xf32, #tpu.memory_space<vmem>>, %arg15: memref<1x16x128xf32, #tpu.memory_space<vmem>>) attributes {dimension_semantics = [#tpu.dimension_semantics<parallel>], iteration_bounds = array<i64: 2>, scalar_prefetch = 0 : i64, scratch_operands = 0 : i64, tpu.core_type = #tpu.core_type<tc>, window_params = [{transform_indices = @transform_0, window_bounds = array<i64: 1, 16, 128>}, {transform_indices = @transform_1, window_bounds = array<i64: 1, 16, 128>}, {transform_indices = @transform_2, window_bounds = array<i64: 1, 16, 128>}, {transform_indices = @transform_3, window_bounds = array<i64: 1, 16, 16>}, {pipeline_mode = #tpu.pipeline_mode<synchronous>, transform_indices = @transform_4, window_bounds = array<i64: 128, 128>}, {pipeline_mode = #tpu.pipeline_mode<synchronous>, transform_indices = @transform_5, window_bounds = array<i64: 1, 128>}, {pipeline_mode = #tpu.pipeline_mode<synchronous>, transform_indices = @transform_6, window_bounds = array<i64: 128, 128>}, {pipeline_mode = #tpu.pipeline_mode<synchronous>, transform_indices = @transform_7, window_bounds = array<i64: 1, 128>}, {pipeline_mode = #tpu.pipeline_mode<synchronous>, transform_indices = @transform_8, window_bounds = array<i64: 128, 128>}, {pipeline_mode = #tpu.pipeline_mode<synchronous>, transform_indices = @transform_9, window_bounds = array<i64: 1, 128>}, {pipeline_mode = #tpu.pipeline_mode<synchronous>, transform_indices = @transform_10, window_bounds = array<i64: 128, 128>}, {pipeline_mode = #tpu.pipeline_mode<synchronous>, transform_indices = @transform_11, window_bounds = array<i64: 1, 128>}, {pipeline_mode = #tpu.pipeline_mode<synchronous>, transform_indices = @transform_12, window_bounds = array<i64: 1, 128>}, {pipeline_mode = #tpu.pipeline_mode<synchronous>, transform_indices = @transform_13, window_bounds = array<i64: 1, 128>}, {transform_indices = @transform_14, window_bounds = array<i64: 1, 16, 128>}]} {
    %c0 = arith.constant 0 : index
    %c0_0 = arith.constant 0 : index
    %c0_1 = arith.constant 0 : index
    %0 = vector.load %arg1[%c0, %c0_0, %c0_1] : memref<1x16x128xf32, #tpu.memory_space<vmem>>, vector<1x16x128xf32>
    %1 = vector.shape_cast %0 : vector<1x16x128xf32> to vector<16x128xf32>
    %c0_2 = arith.constant 0 : index
    %c0_3 = arith.constant 0 : index
    %c0_4 = arith.constant 0 : index
    %2 = vector.load %arg2[%c0_2, %c0_3, %c0_4] : memref<1x16x128xf32, #tpu.memory_space<vmem>>, vector<1x16x128xf32>
    %3 = vector.shape_cast %2 : vector<1x16x128xf32> to vector<16x128xf32>
    %c0_5 = arith.constant 0 : index
    %c0_6 = arith.constant 0 : index
    %c0_7 = arith.constant 0 : index
    %4 = vector.load %arg3[%c0_5, %c0_6, %c0_7] : memref<1x16x128xf32, #tpu.memory_space<vmem>>, vector<1x16x128xf32>
    %5 = vector.shape_cast %4 : vector<1x16x128xf32> to vector<16x128xf32>
    %c0_8 = arith.constant 0 : index
    %c0_9 = arith.constant 0 : index
    %c0_10 = arith.constant 0 : index
    %6 = vector.load %arg4[%c0_8, %c0_9, %c0_10] : memref<1x16x16xf32, #tpu.memory_space<vmem>>, vector<1x16x16xf32>
    %7 = vector.shape_cast %6 : vector<1x16x16xf32> to vector<16x16xf32>
    %cst = arith.constant 5.000000e-01 : f32
    %8 = vector.broadcast %cst : f32 to vector<16x16xf32>
    %9 = arith.cmpf ogt, %7, %8 : vector<16x16xf32>
    %cst_11 = arith.constant -1.000000e+09 : f32
    %cst_12 = arith.constant 0.000000e+00 : f32
    %10 = vector.broadcast %cst_11 : f32 to vector<16x16xf32>
    %11 = vector.broadcast %cst_12 : f32 to vector<16x16xf32>
    %12 = arith.select %9, %10, %11 : vector<16x16xi1>, vector<16x16xf32>
    %c0_13 = arith.constant 0 : index
    %c0_14 = arith.constant 0 : index
    %13 = vector.load %arg5[%c0_13, %c0_14] : memref<128x128xf32, #tpu.memory_space<vmem>>, vector<128x128xf32>
    %cst_15 = arith.constant dense<0.000000e+00> : vector<16x128xf32>
    %14 = tpu.matmul %1, %13, %cst_15 {dimension_numbers = #tpu.dot_dimension_numbers<[1], [0], [0], [1], [0, 0, 1, 1], [], []>} : vector<16x128xf32>, vector<128x128xf32>, vector<16x128xf32> -> vector<16x128xf32>
    %c0_16 = arith.constant 0 : index
    %c0_17 = arith.constant 0 : index
    %15 = vector.load %arg6[%c0_16, %c0_17] : memref<1x128xf32, #tpu.memory_space<vmem>>, vector<1x128xf32>
    %16 = vector.broadcast %15 : vector<1x128xf32> to vector<16x128xf32>
    %17 = arith.addf %14, %16 : vector<16x128xf32>
    %c0_18 = arith.constant 0 : index
    %c0_19 = arith.constant 0 : index
    %18 = vector.load %arg7[%c0_18, %c0_19] : memref<128x128xf32, #tpu.memory_space<vmem>>, vector<128x128xf32>
    %cst_20 = arith.constant dense<0.000000e+00> : vector<16x128xf32>
    %19 = tpu.matmul %3, %18, %cst_20 {dimension_numbers = #tpu.dot_dimension_numbers<[1], [0], [0], [1], [0, 0, 1, 1], [], []>} : vector<16x128xf32>, vector<128x128xf32>, vector<16x128xf32> -> vector<16x128xf32>
    %c0_21 = arith.constant 0 : index
    %c0_22 = arith.constant 0 : index
    %20 = vector.load %arg8[%c0_21, %c0_22] : memref<1x128xf32, #tpu.memory_space<vmem>>, vector<1x128xf32>
    %21 = vector.broadcast %20 : vector<1x128xf32> to vector<16x128xf32>
    %22 = arith.addf %19, %21 : vector<16x128xf32>
    %c0_23 = arith.constant 0 : index
    %c0_24 = arith.constant 0 : index
    %23 = vector.load %arg9[%c0_23, %c0_24] : memref<128x128xf32, #tpu.memory_space<vmem>>, vector<128x128xf32>
    %cst_25 = arith.constant dense<0.000000e+00> : vector<16x128xf32>
    %24 = tpu.matmul %5, %23, %cst_25 {dimension_numbers = #tpu.dot_dimension_numbers<[1], [0], [0], [1], [0, 0, 1, 1], [], []>} : vector<16x128xf32>, vector<128x128xf32>, vector<16x128xf32> -> vector<16x128xf32>
    %c0_26 = arith.constant 0 : index
    %c0_27 = arith.constant 0 : index
    %25 = vector.load %arg10[%c0_26, %c0_27] : memref<1x128xf32, #tpu.memory_space<vmem>>, vector<1x128xf32>
    %26 = vector.broadcast %25 : vector<1x128xf32> to vector<16x128xf32>
    %27 = arith.addf %24, %26 : vector<16x128xf32>
    %cst_28 = arith.constant 0.176776692 : f32
    %28 = vector.broadcast %cst_28 : f32 to vector<16x128xf32>
    %29 = arith.mulf %17, %28 : vector<16x128xf32>
    %c0_29 = arith.constant 0 : index
    %c0_30 = arith.constant 0 : index
    %30 = vector.load %arg12[%c0_29, %c0_30] : memref<1x128xf32, #tpu.memory_space<vmem>>, vector<1x128xf32>
    %31 = vector.broadcast %30 : vector<1x128xf32> to vector<16x128xf32>
    %32 = arith.addf %1, %31 : vector<16x128xf32>
    %33 = vector.extract_strided_slice %29 {offsets = [0, 0], sizes = [16, 32], strides = [1, 1]} : vector<16x128xf32> to vector<16x32xf32>
    %34 = vector.extract_strided_slice %22 {offsets = [0, 0], sizes = [16, 32], strides = [1, 1]} : vector<16x128xf32> to vector<16x32xf32>
    %35 = vector.extract_strided_slice %27 {offsets = [0, 0], sizes = [16, 32], strides = [1, 1]} : vector<16x128xf32> to vector<16x32xf32>
    %cst_31 = arith.constant dense<0.000000e+00> : vector<16x16xf32>
    %36 = tpu.matmul %33, %34, %cst_31 {dimension_numbers = #tpu.dot_dimension_numbers<[1], [1], [0], [0], [0, 0, 1, 0], [], []>} : vector<16x32xf32>, vector<16x32xf32>, vector<16x16xf32> -> vector<16x16xf32>
    %37 = arith.addf %36, %12 : vector<16x16xf32>
    %cst_32 = arith.constant dense<0xFF800000> : vector<16xf32>
    %38 = vector.multi_reduction <maximumf>, %37, %cst_32 [1] : vector<16x16xf32> to vector<16xf32>
    %39 = vector.shape_cast %38 : vector<16xf32> to vector<16x1xf32>
    %40 = vector.broadcast %39 : vector<16x1xf32> to vector<16x16xf32>
    %41 = arith.subf %37, %40 : vector<16x16xf32>
    %42 = math.exp %41 : vector<16x16xf32>
    %cst_33 = arith.constant dense<0.000000e+00> : vector<16xf32>
    %43 = vector.multi_reduction <add>, %42, %cst_33 [1] : vector<16x16xf32> to vector<16xf32>
    %44 = vector.shape_cast %43 : vector<16xf32> to vector<16x1xf32>
    %45 = tpu.reciprocal %44 {approx = true} : vector<16x1xf32> -> vector<16x1xf32>
    %46 = vector.broadcast %45 : vector<16x1xf32> to vector<16x16xf32>
    %47 = arith.mulf %42, %46 : vector<16x16xf32>
    %cst_34 = arith.constant dense<0.000000e+00> : vector<16x32xf32>
    %48 = tpu.matmul %47, %35, %cst_34 {dimension_numbers = #tpu.dot_dimension_numbers<[1], [0], [0], [1], [0, 0, 1, 1], [], []>} : vector<16x16xf32>, vector<16x32xf32>, vector<16x32xf32> -> vector<16x32xf32>
    %c0_35 = arith.constant 0 : index
    %c0_36 = arith.constant 0 : index
    %49 = vector.load %arg11[%c0_35, %c0_36] : memref<128x128xf32, #tpu.memory_space<vmem>>, vector<32x128xf32>
    %cst_37 = arith.constant dense<0.000000e+00> : vector<16x128xf32>
    %50 = tpu.matmul %48, %49, %cst_37 {dimension_numbers = #tpu.dot_dimension_numbers<[1], [0], [0], [1], [0, 0, 1, 1], [], []>} : vector<16x32xf32>, vector<32x128xf32>, vector<16x128xf32> -> vector<16x128xf32>
    %51 = arith.addf %32, %50 : vector<16x128xf32>
    %52 = vector.extract_strided_slice %29 {offsets = [0, 32], sizes = [16, 32], strides = [1, 1]} : vector<16x128xf32> to vector<16x32xf32>
    %53 = vector.extract_strided_slice %22 {offsets = [0, 32], sizes = [16, 32], strides = [1, 1]} : vector<16x128xf32> to vector<16x32xf32>
    %54 = vector.extract_strided_slice %27 {offsets = [0, 32], sizes = [16, 32], strides = [1, 1]} : vector<16x128xf32> to vector<16x32xf32>
    %cst_38 = arith.constant dense<0.000000e+00> : vector<16x16xf32>
    %55 = tpu.matmul %52, %53, %cst_38 {dimension_numbers = #tpu.dot_dimension_numbers<[1], [1], [0], [0], [0, 0, 1, 0], [], []>} : vector<16x32xf32>, vector<16x32xf32>, vector<16x16xf32> -> vector<16x16xf32>
    %56 = arith.addf %55, %12 : vector<16x16xf32>
    %cst_39 = arith.constant dense<0xFF800000> : vector<16xf32>
    %57 = vector.multi_reduction <maximumf>, %56, %cst_39 [1] : vector<16x16xf32> to vector<16xf32>
    %58 = vector.shape_cast %57 : vector<16xf32> to vector<16x1xf32>
    %59 = vector.broadcast %58 : vector<16x1xf32> to vector<16x16xf32>
    %60 = arith.subf %56, %59 : vector<16x16xf32>
    %61 = math.exp %60 : vector<16x16xf32>
    %cst_40 = arith.constant dense<0.000000e+00> : vector<16xf32>
    %62 = vector.multi_reduction <add>, %61, %cst_40 [1] : vector<16x16xf32> to vector<16xf32>
    %63 = vector.shape_cast %62 : vector<16xf32> to vector<16x1xf32>
    %64 = tpu.reciprocal %63 {approx = true} : vector<16x1xf32> -> vector<16x1xf32>
    %65 = vector.broadcast %64 : vector<16x1xf32> to vector<16x16xf32>
    %66 = arith.mulf %61, %65 : vector<16x16xf32>
    %cst_41 = arith.constant dense<0.000000e+00> : vector<16x32xf32>
    %67 = tpu.matmul %66, %54, %cst_41 {dimension_numbers = #tpu.dot_dimension_numbers<[1], [0], [0], [1], [0, 0, 1, 1], [], []>} : vector<16x16xf32>, vector<16x32xf32>, vector<16x32xf32> -> vector<16x32xf32>
    %c32 = arith.constant 32 : index
    %c0_42 = arith.constant 0 : index
    %68 = vector.load %arg11[%c32, %c0_42] : memref<128x128xf32, #tpu.memory_space<vmem>>, vector<32x128xf32>
    %cst_43 = arith.constant dense<0.000000e+00> : vector<16x128xf32>
    %69 = tpu.matmul %67, %68, %cst_43 {dimension_numbers = #tpu.dot_dimension_numbers<[1], [0], [0], [1], [0, 0, 1, 1], [], []>} : vector<16x32xf32>, vector<32x128xf32>, vector<16x128xf32> -> vector<16x128xf32>
    %70 = arith.addf %51, %69 : vector<16x128xf32>
    %71 = vector.extract_strided_slice %29 {offsets = [0, 64], sizes = [16, 32], strides = [1, 1]} : vector<16x128xf32> to vector<16x32xf32>
    %72 = vector.extract_strided_slice %22 {offsets = [0, 64], sizes = [16, 32], strides = [1, 1]} : vector<16x128xf32> to vector<16x32xf32>
    %73 = vector.extract_strided_slice %27 {offsets = [0, 64], sizes = [16, 32], strides = [1, 1]} : vector<16x128xf32> to vector<16x32xf32>
    %cst_44 = arith.constant dense<0.000000e+00> : vector<16x16xf32>
    %74 = tpu.matmul %71, %72, %cst_44 {dimension_numbers = #tpu.dot_dimension_numbers<[1], [1], [0], [0], [0, 0, 1, 0], [], []>} : vector<16x32xf32>, vector<16x32xf32>, vector<16x16xf32> -> vector<16x16xf32>
    %75 = arith.addf %74, %12 : vector<16x16xf32>
    %cst_45 = arith.constant dense<0xFF800000> : vector<16xf32>
    %76 = vector.multi_reduction <maximumf>, %75, %cst_45 [1] : vector<16x16xf32> to vector<16xf32>
    %77 = vector.shape_cast %76 : vector<16xf32> to vector<16x1xf32>
    %78 = vector.broadcast %77 : vector<16x1xf32> to vector<16x16xf32>
    %79 = arith.subf %75, %78 : vector<16x16xf32>
    %80 = math.exp %79 : vector<16x16xf32>
    %cst_46 = arith.constant dense<0.000000e+00> : vector<16xf32>
    %81 = vector.multi_reduction <add>, %80, %cst_46 [1] : vector<16x16xf32> to vector<16xf32>
    %82 = vector.shape_cast %81 : vector<16xf32> to vector<16x1xf32>
    %83 = tpu.reciprocal %82 {approx = true} : vector<16x1xf32> -> vector<16x1xf32>
    %84 = vector.broadcast %83 : vector<16x1xf32> to vector<16x16xf32>
    %85 = arith.mulf %80, %84 : vector<16x16xf32>
    %cst_47 = arith.constant dense<0.000000e+00> : vector<16x32xf32>
    %86 = tpu.matmul %85, %73, %cst_47 {dimension_numbers = #tpu.dot_dimension_numbers<[1], [0], [0], [1], [0, 0, 1, 1], [], []>} : vector<16x16xf32>, vector<16x32xf32>, vector<16x32xf32> -> vector<16x32xf32>
    %c64 = arith.constant 64 : index
    %c0_48 = arith.constant 0 : index
    %87 = vector.load %arg11[%c64, %c0_48] : memref<128x128xf32, #tpu.memory_space<vmem>>, vector<32x128xf32>
    %cst_49 = arith.constant dense<0.000000e+00> : vector<16x128xf32>
    %88 = tpu.matmul %86, %87, %cst_49 {dimension_numbers = #tpu.dot_dimension_numbers<[1], [0], [0], [1], [0, 0, 1, 1], [], []>} : vector<16x32xf32>, vector<32x128xf32>, vector<16x128xf32> -> vector<16x128xf32>
    %89 = arith.addf %70, %88 : vector<16x128xf32>
    %90 = vector.extract_strided_slice %29 {offsets = [0, 96], sizes = [16, 32], strides = [1, 1]} : vector<16x128xf32> to vector<16x32xf32>
    %91 = vector.extract_strided_slice %22 {offsets = [0, 96], sizes = [16, 32], strides = [1, 1]} : vector<16x128xf32> to vector<16x32xf32>
    %92 = vector.extract_strided_slice %27 {offsets = [0, 96], sizes = [16, 32], strides = [1, 1]} : vector<16x128xf32> to vector<16x32xf32>
    %cst_50 = arith.constant dense<0.000000e+00> : vector<16x16xf32>
    %93 = tpu.matmul %90, %91, %cst_50 {dimension_numbers = #tpu.dot_dimension_numbers<[1], [1], [0], [0], [0, 0, 1, 0], [], []>} : vector<16x32xf32>, vector<16x32xf32>, vector<16x16xf32> -> vector<16x16xf32>
    %94 = arith.addf %93, %12 : vector<16x16xf32>
    %cst_51 = arith.constant dense<0xFF800000> : vector<16xf32>
    %95 = vector.multi_reduction <maximumf>, %94, %cst_51 [1] : vector<16x16xf32> to vector<16xf32>
    %96 = vector.shape_cast %95 : vector<16xf32> to vector<16x1xf32>
    %97 = vector.broadcast %96 : vector<16x1xf32> to vector<16x16xf32>
    %98 = arith.subf %94, %97 : vector<16x16xf32>
    %99 = math.exp %98 : vector<16x16xf32>
    %cst_52 = arith.constant dense<0.000000e+00> : vector<16xf32>
    %100 = vector.multi_reduction <add>, %99, %cst_52 [1] : vector<16x16xf32> to vector<16xf32>
    %101 = vector.shape_cast %100 : vector<16xf32> to vector<16x1xf32>
    %102 = tpu.reciprocal %101 {approx = true} : vector<16x1xf32> -> vector<16x1xf32>
    %103 = vector.broadcast %102 : vector<16x1xf32> to vector<16x16xf32>
    %104 = arith.mulf %99, %103 : vector<16x16xf32>
    %cst_53 = arith.constant dense<0.000000e+00> : vector<16x32xf32>
    %105 = tpu.matmul %104, %92, %cst_53 {dimension_numbers = #tpu.dot_dimension_numbers<[1], [0], [0], [1], [0, 0, 1, 1], [], []>} : vector<16x16xf32>, vector<16x32xf32>, vector<16x32xf32> -> vector<16x32xf32>
    %c96 = arith.constant 96 : index
    %c0_54 = arith.constant 0 : index
    %106 = vector.load %arg11[%c96, %c0_54] : memref<128x128xf32, #tpu.memory_space<vmem>>, vector<32x128xf32>
    %cst_55 = arith.constant dense<0.000000e+00> : vector<16x128xf32>
    %107 = tpu.matmul %105, %106, %cst_55 {dimension_numbers = #tpu.dot_dimension_numbers<[1], [0], [0], [1], [0, 0, 1, 1], [], []>} : vector<16x32xf32>, vector<32x128xf32>, vector<16x128xf32> -> vector<16x128xf32>
    %108 = arith.addf %89, %107 : vector<16x128xf32>
    %cst_56 = arith.constant dense<0.000000e+00> : vector<16xf32>
    %109 = vector.multi_reduction <add>, %108, %cst_56 [1] : vector<16x128xf32> to vector<16xf32>
    %110 = vector.shape_cast %109 : vector<16xf32> to vector<16x1xf32>
    %cst_57 = arith.constant 1.280000e+02 : f32
    %111 = vector.broadcast %cst_57 : f32 to vector<16x1xf32>
    %112 = arith.divf %110, %111 : vector<16x1xf32>
    %113 = vector.broadcast %112 : vector<16x1xf32> to vector<16x128xf32>
    %114 = arith.subf %108, %113 : vector<16x128xf32>
    %115 = arith.mulf %114, %114 : vector<16x128xf32>
    %cst_58 = arith.constant dense<0.000000e+00> : vector<16xf32>
    %116 = vector.multi_reduction <add>, %115, %cst_58 [1] : vector<16x128xf32> to vector<16xf32>
    %117 = vector.shape_cast %116 : vector<16xf32> to vector<16x1xf32>
    %cst_59 = arith.constant 1.280000e+02 : f32
    %118 = vector.broadcast %cst_59 : f32 to vector<16x1xf32>
    %119 = arith.divf %117, %118 : vector<16x1xf32>
    %120 = vector.broadcast %112 : vector<16x1xf32> to vector<16x128xf32>
    %121 = arith.subf %108, %120 : vector<16x128xf32>
    %cst_60 = arith.constant 9.99999974E-6 : f32
    %122 = vector.broadcast %cst_60 : f32 to vector<16x1xf32>
    %123 = arith.addf %119, %122 : vector<16x1xf32>
    %124 = math.rsqrt %123 : vector<16x1xf32>
    %125 = vector.broadcast %124 : vector<16x1xf32> to vector<16x128xf32>
    %126 = arith.mulf %121, %125 : vector<16x128xf32>
    %c0_61 = arith.constant 0 : index
    %c0_62 = arith.constant 0 : index
    %127 = vector.load %arg13[%c0_61, %c0_62] : memref<1x128xf32, #tpu.memory_space<vmem>>, vector<1x128xf32>
    %128 = vector.broadcast %127 : vector<1x128xf32> to vector<16x128xf32>
    %129 = arith.mulf %126, %128 : vector<16x128xf32>
    %c0_63 = arith.constant 0 : index
    %c0_64 = arith.constant 0 : index
    %130 = vector.load %arg14[%c0_63, %c0_64] : memref<1x128xf32, #tpu.memory_space<vmem>>, vector<1x128xf32>
    %131 = vector.broadcast %130 : vector<1x128xf32> to vector<16x128xf32>
    %132 = arith.addf %129, %131 : vector<16x128xf32>
    %c0_65 = arith.constant 0 : index
    %c0_66 = arith.constant 0 : index
    %c0_67 = arith.constant 0 : index
    %133 = vector.load %arg15[%c0_65, %c0_66, %c0_67] : memref<1x16x128xf32, #tpu.memory_space<vmem>>, vector<1x16x128xf32>
    %134 = vector.shape_cast %133 : vector<1x16x128xf32> to vector<16x128xf32>
    %135 = vector.shape_cast %132 : vector<16x128xf32> to vector<1x16x128xf32>
    tpu.vector_store %arg15[%c0_65, %c0_66, %c0_67], %135 {strides = array<i32>} : memref<1x16x128xf32, #tpu.memory_space<vmem>>, vector<1x16x128xf32>,
    return
  }
  func.func @transform_0(%arg0: i32) -> (i32, i32, i32) {
    %c0_i32 = arith.constant 0 : i32
    %c0_i32_0 = arith.constant 0 : i32
    %c0_i32_1 = arith.constant 0 : i32
    return %arg0, %c0_i32, %c0_i32_0 : i32, i32, i32
  }
  func.func @transform_1(%arg0: i32) -> (i32, i32, i32) {
    %c0_i32 = arith.constant 0 : i32
    %c0_i32_0 = arith.constant 0 : i32
    %c0_i32_1 = arith.constant 0 : i32
    return %arg0, %c0_i32, %c0_i32_0 : i32, i32, i32
  }
  func.func @transform_2(%arg0: i32) -> (i32, i32, i32) {
    %c0_i32 = arith.constant 0 : i32
    %c0_i32_0 = arith.constant 0 : i32
    %c0_i32_1 = arith.constant 0 : i32
    return %arg0, %c0_i32, %c0_i32_0 : i32, i32, i32
  }
  func.func @transform_3(%arg0: i32) -> (i32, i32, i32) {
    %c0_i32 = arith.constant 0 : i32
    %c0_i32_0 = arith.constant 0 : i32
    %c0_i32_1 = arith.constant 0 : i32
    return %arg0, %c0_i32, %c0_i32_0 : i32, i32, i32
  }
  func.func @transform_4(%arg0: i32) -> (i32, i32) {
    %c0_i32 = arith.constant 0 : i32
    %c0_i32_0 = arith.constant 0 : i32
    %c0_i32_1 = arith.constant 0 : i32
    return %c0_i32, %c0_i32_0 : i32, i32
  }
  func.func @transform_5(%arg0: i32) -> (i32, i32) {
    %c0_i32 = arith.constant 0 : i32
    %c0_i32_0 = arith.constant 0 : i32
    %c0_i32_1 = arith.constant 0 : i32
    return %c0_i32, %c0_i32_0 : i32, i32
  }
  func.func @transform_6(%arg0: i32) -> (i32, i32) {
    %c0_i32 = arith.constant 0 : i32
    %c0_i32_0 = arith.constant 0 : i32
    %c0_i32_1 = arith.constant 0 : i32
    return %c0_i32, %c0_i32_0 : i32, i32
  }
  func.func @transform_7(%arg0: i32) -> (i32, i32) {
    %c0_i32 = arith.constant 0 : i32
    %c0_i32_0 = arith.constant 0 : i32
    %c0_i32_1 = arith.constant 0 : i32
    return %c0_i32, %c0_i32_0 : i32, i32
  }
  func.func @transform_8(%arg0: i32) -> (i32, i32) {
    %c0_i32 = arith.constant 0 : i32
    %c0_i32_0 = arith.constant 0 : i32
    %c0_i32_1 = arith.constant 0 : i32
    return %c0_i32, %c0_i32_0 : i32, i32
  }
  func.func @transform_9(%arg0: i32) -> (i32, i32) {
    %c0_i32 = arith.constant 0 : i32
    %c0_i32_0 = arith.constant 0 : i32
    %c0_i32_1 = arith.constant 0 : i32
    return %c0_i32, %c0_i32_0 : i32, i32
  }
  func.func @transform_10(%arg0: i32) -> (i32, i32) {
    %c0_i32 = arith.constant 0 : i32
    %c0_i32_0 = arith.constant 0 : i32
    %c0_i32_1 = arith.constant 0 : i32
    return %c0_i32, %c0_i32_0 : i32, i32
  }
  func.func @transform_11(%arg0: i32) -> (i32, i32) {
    %c0_i32 = arith.constant 0 : i32
    %c0_i32_0 = arith.constant 0 : i32
    %c0_i32_1 = arith.constant 0 : i32
    return %c0_i32, %c0_i32_0 : i32, i32
  }
  func.func @transform_12(%arg0: i32) -> (i32, i32) {
    %c0_i32 = arith.constant 0 : i32
    %c0_i32_0 = arith.constant 0 : i32
    %c0_i32_1 = arith.constant 0 : i32
    return %c0_i32, %c0_i32_0 : i32, i32
  }
  func.func @transform_13(%arg0: i32) -> (i32, i32) {
    %c0_i32 = arith.constant 0 : i32
    %c0_i32_0 = arith.constant 0 : i32
    %c0_i32_1 = arith.constant 0 : i32
    return %c0_i32, %c0_i32_0 : i32, i32
  }
  func.func @transform_14(%arg0: i32) -> (i32, i32, i32) {
    %c0_i32 = arith.constant 0 : i32
    %c0_i32_0 = arith.constant 0 : i32
    %c0_i32_1 = arith.constant 0 : i32
    return %arg0, %c0_i32, %c0_i32_0 : i32, i32, i32
  }
}

</mosaic_0001>

<llo_original>
// kernel: tpu_custom_call.1
$region0: #{tpu_custom_call.1}
  #allocation0 [shape = 'u32[]', space=smem, size = 0x4, offset = 0x4, fixed_abs, tag = 'smem constant byte address 0x4 - core index']
  #allocation1 [shape = 'u32[144,128]{1,0:T(1,128)}', space=vmem, size = 0x12000, scoped, tag = 'internal scratch']
  %s0 = inlined_call_operand.hbm [shape: f32[2,16,128], index: 0, kind: input, shape index: {}]
  %s1 = inlined_call_operand.hbm [shape: f32[2,16,128], index: 1, kind: input, shape index: {}]
  %s2 = inlined_call_operand.hbm [shape: f32[2,16,128], index: 2, kind: input, shape index: {}]
  %s3 = inlined_call_operand.hbm [shape: f32[2,16,16], index: 3, kind: input, shape index: {}]
  %s4 = inlined_call_operand.hbm [shape: f32[128,128], index: 4, kind: input, shape index: {}]
  %s5 = inlined_call_operand.vmem [shape: f32[1,128], index: 5, kind: input, shape index: {}]
  %s6 = inlined_call_operand.hbm [shape: f32[128,128], index: 6, kind: input, shape index: {}]
  %s7 = inlined_call_operand.vmem [shape: f32[1,128], index: 7, kind: input, shape index: {}]
  %s8 = inlined_call_operand.hbm [shape: f32[128,128], index: 8, kind: input, shape index: {}]
  %s9 = inlined_call_operand.vmem [shape: f32[1,128], index: 9, kind: input, shape index: {}]
  %s10 = inlined_call_operand.hbm [shape: f32[128,128], index: 10, kind: input, shape index: {}]
  %s11 = inlined_call_operand.vmem [shape: f32[1,128], index: 11, kind: input, shape index: {}]
  %s12 = inlined_call_operand.vmem [shape: f32[1,128], index: 12, kind: input, shape index: {}]
  %s13 = inlined_call_operand.vmem [shape: f32[1,128], index: 13, kind: input, shape index: {}]
  %s14 = inlined_call_operand.hbm [shape: f32[2,16,128], index: 14, kind: output, shape index: {}]
  %s15 = sld [smem:[#allocation0]]
  $region121: #{tpu_custom_call.1} parent=0
    _
  %s17 = ssub.s32 1, %s15
  %s18 = scalar_select 0, %s17, %s15
  $region1: #{tpu_custom_call.1} parent=0
    #allocation2 [shape = 'u8[16384]{0}', space=vmem, size = 0x4000, scoped, tag = 'input window, operand 0']
    #allocation3 [shape = 's32[2]{0}', space=sflag, size = 0x8, scoped, tag = 'scoped memory for tpu_custom_call.1']
    #allocation4 [shape = 's32[2]{0}', space=sflag, size = 0x8, scoped, tag = 'scoped memory for tpu_custom_call.1']
    #allocation5 [shape = 'u8[16384]{0}', space=vmem, size = 0x4000, scoped, tag = 'input window, operand 1']
    #allocation6 [shape = 's32[2]{0}', space=sflag, size = 0x8, scoped, tag = 'scoped memory for tpu_custom_call.1']
    #allocation7 [shape = 'u8[16384]{0}', space=vmem, size = 0x4000, scoped, tag = 'input window, operand 2']
    #allocation8 [shape = 'u8[16384]{0}', space=vmem, size = 0x4000, scoped, tag = 'input window, operand 3']
    #allocation9 [shape = 's32[2]{0}', space=sflag, size = 0x8, scoped, tag = 'scoped memory for tpu_custom_call.1']
    #allocation10 [shape = 'u8[65536]{0}', space=vmem, size = 0x10000, scoped, tag = 'input window, operand 4, single buffered']
    #allocation11 [shape = 'u8[65536]{0}', space=vmem, size = 0x10000, scoped, tag = 'input window, operand 6, single buffered']
    #allocation12 [shape = 's32[1]{0}', space=sflag, size = 0x4, scoped, tag = 'scoped memory for tpu_custom_call.1']
    #allocation13 [shape = 'u8[65536]{0}', space=vmem, size = 0x10000, scoped, tag = 'input window, operand 8, single buffered']
    #allocation14 [shape = 'u8[65536]{0}', space=vmem, size = 0x10000, scoped, tag = 'input window, operand 10, single buffered']
    #allocation15 [shape = 's32[1]{0}', space=sflag, size = 0x4, scoped, tag = 'scoped memory for tpu_custom_call.1']
    #allocation16 [shape = 'u8[16384]{0}', space=vmem, size = 0x4000, scoped, tag = 'output window, operand 0']
    %19 = vsyncpa [#allocation3], 0
    %s20 = scalar_lea.sflag [#allocation3], 1
    %21 = vsyncpa %s20, 0
    %22 = vsyncpa [#allocation6], 0
    %s23 = scalar_lea.sflag [#allocation6], 1
    %24 = vsyncpa %s23, 0
    %25 = vsyncpa [#allocation9], 0
    %s26 = scalar_lea.sflag [#allocation9], 1
    %27 = vsyncpa %s26, 0
    %28 = vsyncpa [#allocation12], 0
    %29 = vsyncpa [#allocation15], 0
    %30 = vsyncpa [#allocation4], 0
    %s31 = scalar_lea.sflag [#allocation4], 1
    %32 = vsyncpa %s31, 0
    loop: start=0, step=1, limit=4
    $region2: #{tpu_custom_call.1} parent=1 // loop_pre_header
      _
    $region3: #{tpu_custom_call.1} parent=1 // loop_header
      %s34 = sphi 0, %s38
      %p35 = scmp.ge.s32.totalorder %s34, 4
      %s44 = sphi 0, %s46
      %s47 = sphi 0, %s44
      %s48 = sphi 0, %s47
      %s64 = sphi 0, %s48
      %s70 = sphi 0, %s72
      %s73 = sphi 0, %s70
      %s74 = sphi 0, %s73
      %s90 = sphi 0, %s74
      %s96 = sphi 0, %s98
      %s99 = sphi 0, %s96
      %s100 = sphi 0, %s99
      %s116 = sphi 0, %s100
      %s122 = sphi 0, %s124
      %s125 = sphi 0, %s122
      %s126 = sphi 0, %s125
      %s142 = sphi 0, %s126
      %s146 = sphi 0, %s146
      %s148 = sphi 0, %s146
      %s149 = sphi 0, %s148
      %s163 = sphi 0, %s149
      %s167 = sphi 0, %s167
      %s169 = sphi 0, %s167
      %s170 = sphi 0, %s169
      %s184 = sphi 0, %s170
      %s188 = sphi 0, %s188
      %s190 = sphi 0, %s188
      %s191 = sphi 0, %s190
      %s205 = sphi 0, %s191
      %s209 = sphi 0, %s209
      %s211 = sphi 0, %s209
      %s212 = sphi 0, %s211
      %s226 = sphi 0, %s212
      %s230 = sphi 0, %s230
      %s232 = sphi 0, %s230
      %s233 = sphi 0, %s232
      %s247 = sphi 0, %s233
      %s251 = sphi 0, %s251
      %s253 = sphi 0, %s251
      %s254 = sphi 0, %s253
      %s268 = sphi 0, %s254
      %s272 = sphi 0, %s272
      %s274 = sphi 0, %s272
      %s275 = sphi 0, %s274
      %s289 = sphi 0, %s275
      %s293 = sphi 0, %s293
      %s295 = sphi 0, %s293
      %s296 = sphi 0, %s295
      %s310 = sphi 0, %s296
      %s314 = sphi 0, %s314
      %s316 = sphi 0, %s314
      %s317 = sphi 0, %s316
      %s331 = sphi 0, %s317
      %s335 = sphi 0, %s335
      %s337 = sphi 0, %s335
      %s338 = sphi 0, %s337
      %s352 = sphi 0, %s338
      %s358 = sphi 0, %s360
      %s361 = sphi 0, %s358
      %s362 = sphi 0, %s361
      %s378 = sphi 0, %s362
    $region4: #{tpu_custom_call.1} parent=1 // loop_header_branch
      %37 = sbr.rel (%p35) target = $region8
    $region5: #{tpu_custom_call.1} parent=1 // loop_body
      %s39 = ssub.s32 %s34, 1
      %s40 = ssub.s32 %s34, 2
      %s41 = sadd.s32 %s34, 1
      %s42 = ssub.s32 %s34, %s41
      %p43 = scmp.eq.s32.totalorder %s42, 0
      %s45 = sadd.s32 %s44, 1
      %s46 = scalar_select %p43, %s44, %s45
      %p49 = pneg %p43
      %p50 = scmp.eq.s32.totalorder %s34, 1
      %p51 = por %p49, %p50
      %p52 = scmp.ne.s32.totalorder %s44, %s47
      %p53 = scmp.eq.s32.totalorder %s34, 0
      %p54 = por %p52, %p53
      %p55 = scmp.ne.s32.totalorder %s44, %s47
      %p56 = scmp.eq.s32.totalorder %s39, 1
      %p57 = por %p55, %p56
      %p58 = scmp.ne.s32.totalorder %s47, %s48
      %p59 = scmp.eq.s32.totalorder %s39, 0
      %p60 = por %p58, %p59
      %p61 = scmp.ne.s32.totalorder %s47, %s48
      %p62 = scmp.eq.s32.totalorder %s40, 1
      %p63 = por %p61, %p62
      %p65 = scmp.ne.s32.totalorder %s48, %s64
      %p66 = scmp.eq.s32.totalorder %s40, 0
      %p67 = por %p65, %p66
      %s68 = ssub.s32 %s34, %s41
      %p69 = scmp.eq.s32.totalorder %s68, 0
      %s71 = sadd.s32 %s70, 1
      %s72 = scalar_select %p69, %s70, %s71
      %p75 = pneg %p69
      %p76 = scmp.eq.s32.totalorder %s34, 1
      %p77 = por %p75, %p76
      %p78 = scmp.ne.s32.totalorder %s70, %s73
      %p79 = scmp.eq.s32.totalorder %s34, 0
      %p80 = por %p78, %p79
      %p81 = scmp.ne.s32.totalorder %s70, %s73
      %p82 = scmp.eq.s32.totalorder %s39, 1
      %p83 = por %p81, %p82
      %p84 = scmp.ne.s32.totalorder %s73, %s74
      %p85 = scmp.eq.s32.totalorder %s39, 0
      %p86 = por %p84, %p85
      %p87 = scmp.ne.s32.totalorder %s73, %s74
      %p88 = scmp.eq.s32.totalorder %s40, 1
      %p89 = por %p87, %p88
      %p91 = scmp.ne.s32.totalorder %s74, %s90
      %p92 = scmp.eq.s32.totalorder %s40, 0
      %p93 = por %p91, %p92
      %s94 = ssub.s32 %s34, %s41
      %p95 = scmp.eq.s32.totalorder %s94, 0
      %s97 = sadd.s32 %s96, 1
      %s98 = scalar_select %p95, %s96, %s97
      %p101 = pneg %p95
      %p102 = scmp.eq.s32.totalorder %s34, 1
      %p103 = por %p101, %p102
      %p104 = scmp.ne.s32.totalorder %s96, %s99
      %p105 = scmp.eq.s32.totalorder %s34, 0
      %p106 = por %p104, %p105
      %p107 = scmp.ne.s32.totalorder %s96, %s99
      %p108 = scmp.eq.s32.totalorder %s39, 1
      %p109 = por %p107, %p108
      %p110 = scmp.ne.s32.totalorder %s99, %s100
      %p111 = scmp.eq.s32.totalorder %s39, 0
      %p112 = por %p110, %p111
      %p113 = scmp.ne.s32.totalorder %s99, %s100
      %p114 = scmp.eq.s32.totalorder %s40, 1
      %p115 = por %p113, %p114
      %p117 = scmp.ne.s32.totalorder %s100, %s116
      %p118 = scmp.eq.s32.totalorder %s40, 0
      %p119 = por %p117, %p118
      %s120 = ssub.s32 %s34, %s41
      %p121 = scmp.eq.s32.totalorder %s120, 0
      %s123 = sadd.s32 %s122, 1
      %s124 = scalar_select %p121, %s122, %s123
      %p127 = pneg %p121
      %p128 = scmp.eq.s32.totalorder %s34, 1
      %p129 = por %p127, %p128
      %p130 = scmp.ne.s32.totalorder %s122, %s125
      %p131 = scmp.eq.s32.totalorder %s34, 0
      %p132 = por %p130, %p131
      %p133 = scmp.ne.s32.totalorder %s122, %s125
      %p134 = scmp.eq.s32.totalorder %s39, 1
      %p135 = por %p133, %p134
      %p136 = scmp.ne.s32.totalorder %s125, %s126
      %p137 = scmp.eq.s32.totalorder %s39, 0
      %p138 = por %p136, %p137
      %p139 = scmp.ne.s32.totalorder %s125, %s126
      %p140 = scmp.eq.s32.totalorder %s40, 1
      %p141 = por %p139, %p140
      %p143 = scmp.ne.s32.totalorder %s126, %s142
      %p144 = scmp.eq.s32.totalorder %s40, 0
      %p145 = por %p143, %p144
      %s147 = sadd.s32 %s146, 1
      %p150 = scmp.eq.s32.totalorder %s34, 1
      %p151 = scmp.ne.s32.totalorder %s146, %s148
      %p152 = scmp.eq.s32.totalorder %s34, 0
      %p153 = por %p151, %p152
      %p154 = scmp.ne.s32.totalorder %s146, %s148
      %p155 = scmp.eq.s32.totalorder %s39, 1
      %p156 = por %p154, %p155
      %p157 = scmp.ne.s32.totalorder %s148, %s149
      %p158 = scmp.eq.s32.totalorder %s39, 0
      %p159 = por %p157, %p158
      %p160 = scmp.ne.s32.totalorder %s148, %s149
      %p161 = scmp.eq.s32.totalorder %s40, 1
      %p162 = por %p160, %p161
      %p164 = scmp.ne.s32.totalorder %s149, %s163
      %p165 = scmp.eq.s32.totalorder %s40, 0
      %p166 = por %p164, %p165
      %s168 = sadd.s32 %s167, 1
      %p171 = scmp.eq.s32.totalorder %s34, 1
      %p172 = scmp.ne.s32.totalorder %s167, %s169
      %p173 = scmp.eq.s32.totalorder %s34, 0
      %p174 = por %p172, %p173
      %p175 = scmp.ne.s32.totalorder %s167, %s169
      %p176 = scmp.eq.s32.totalorder %s39, 1
      %p177 = por %p175, %p176
      %p178 = scmp.ne.s32.totalorder %s169, %s170
      %p179 = scmp.eq.s32.totalorder %s39, 0
      %p180 = por %p178, %p179
      %p181 = scmp.ne.s32.totalorder %s169, %s170
      %p182 = scmp.eq.s32.totalorder %s40, 1
      %p183 = por %p181, %p182
      %p185 = scmp.ne.s32.totalorder %s170, %s184
      %p186 = scmp.eq.s32.totalorder %s40, 0
      %p187 = por %p185, %p186
      %s189 = sadd.s32 %s188, 1
      %p192 = scmp.eq.s32.totalorder %s34, 1
      %p193 = scmp.ne.s32.totalorder %s188, %s190
      %p194 = scmp.eq.s32.totalorder %s34, 0
      %p195 = por %p193, %p194
      %p196 = scmp.ne.s32.totalorder %s188, %s190
      %p197 = scmp.eq.s32.totalorder %s39, 1
      %p198 = por %p196, %p197
      %p199 = scmp.ne.s32.totalorder %s190, %s191
      %p200 = scmp.eq.s32.totalorder %s39, 0
      %p201 = por %p199, %p200
      %p202 = scmp.ne.s32.totalorder %s190, %s191
      %p203 = scmp.eq.s32.totalorder %s40, 1
      %p204 = por %p202, %p203
      %p206 = scmp.ne.s32.totalorder %s191, %s205
      %p207 = scmp.eq.s32.totalorder %s40, 0
      %p208 = por %p206, %p207
      %s210 = sadd.s32 %s209, 1
      %p213 = scmp.eq.s32.totalorder %s34, 1
      %p214 = scmp.ne.s32.totalorder %s209, %s211
      %p215 = scmp.eq.s32.totalorder %s34, 0
      %p216 = por %p214, %p215
      %p217 = scmp.ne.s32.totalorder %s209, %s211
      %p218 = scmp.eq.s32.totalorder %s39, 1
      %p219 = por %p217, %p218
      %p220 = scmp.ne.s32.totalorder %s211, %s212
      %p221 = scmp.eq.s32.totalorder %s39, 0
      %p222 = por %p220, %p221
      %p223 = scmp.ne.s32.totalorder %s211, %s212
      %p224 = scmp.eq.s32.totalorder %s40, 1
      %p225 = por %p223, %p224
      %p227 = scmp.ne.s32.totalorder %s212, %s226
      %p228 = scmp.eq.s32.totalorder %s40, 0
      %p229 = por %p227, %p228
      %s231 = sadd.s32 %s230, 1
      %p234 = scmp.eq.s32.totalorder %s34, 1
      %p235 = scmp.ne.s32.totalorder %s230, %s232
      %p236 = scmp.eq.s32.totalorder %s34, 0
      %p237 = por %p235, %p236
      %p238 = scmp.ne.s32.totalorder %s230, %s232
      %p239 = scmp.eq.s32.totalorder %s39, 1
      %p240 = por %p238, %p239
      %p241 = scmp.ne.s32.totalorder %s232, %s233
      %p242 = scmp.eq.s32.totalorder %s39, 0
      %p243 = por %p241, %p242
      %p244 = scmp.ne.s32.totalorder %s232, %s233
      %p245 = scmp.eq.s32.totalorder %s40, 1
      %p246 = por %p244, %p245
      %p248 = scmp.ne.s32.totalorder %s233, %s247
      %p249 = scmp.eq.s32.totalorder %s40, 0
      %p250 = por %p248, %p249
      %s252 = sadd.s32 %s251, 1
      %p255 = scmp.eq.s32.totalorder %s34, 1
      %p256 = scmp.ne.s32.totalorder %s251, %s253
      %p257 = scmp.eq.s32.totalorder %s34, 0
      %p258 = por %p256, %p257
      %p259 = scmp.ne.s32.totalorder %s251, %s253
      %p260 = scmp.eq.s32.totalorder %s39, 1
      %p261 = por %p259, %p260
      %p262 = scmp.ne.s32.totalorder %s253, %s254
      %p263 = scmp.eq.s32.totalorder %s39, 0
      %p264 = por %p262, %p263
      %p265 = scmp.ne.s32.totalorder %s253, %s254
      %p266 = scmp.eq.s32.totalorder %s40, 1
      %p267 = por %p265, %p266
      %p269 = scmp.ne.s32.totalorder %s254, %s268
      %p270 = scmp.eq.s32.totalorder %s40, 0
      %p271 = por %p269, %p270
      %s273 = sadd.s32 %s272, 1
      %p276 = scmp.eq.s32.totalorder %s34, 1
      %p277 = scmp.ne.s32.totalorder %s272, %s274
      %p278 = scmp.eq.s32.totalorder %s34, 0
      %p279 = por %p277, %p278
      %p280 = scmp.ne.s32.totalorder %s272, %s274
      %p281 = scmp.eq.s32.totalorder %s39, 1
      %p282 = por %p280, %p281
      %p283 = scmp.ne.s32.totalorder %s274, %s275
      %p284 = scmp.eq.s32.totalorder %s39, 0
      %p285 = por %p283, %p284
      %p286 = scmp.ne.s32.totalorder %s274, %s275
      %p287 = scmp.eq.s32.totalorder %s40, 1
      %p288 = por %p286, %p287
      %p290 = scmp.ne.s32.totalorder %s275, %s289
      %p291 = scmp.eq.s32.totalorder %s40, 0
      %p292 = por %p290, %p291
      %s294 = sadd.s32 %s293, 1
      %p297 = scmp.eq.s32.totalorder %s34, 1
      %p298 = scmp.ne.s32.totalorder %s293, %s295
      %p299 = scmp.eq.s32.totalorder %s34, 0
      %p300 = por %p298, %p299
      %p301 = scmp.ne.s32.totalorder %s293, %s295
      %p302 = scmp.eq.s32.totalorder %s39, 1
      %p303 = por %p301, %p302
      %p304 = scmp.ne.s32.totalorder %s295, %s296
      %p305 = scmp.eq.s32.totalorder %s39, 0
      %p306 = por %p304, %p305
      %p307 = scmp.ne.s32.totalorder %s295, %s296
      %p308 = scmp.eq.s32.totalorder %s40, 1
      %p309 = por %p307, %p308
      %p311 = scmp.ne.s32.totalorder %s296, %s310
      %p312 = scmp.eq.s32.totalorder %s40, 0
      %p313 = por %p311, %p312
      %s315 = sadd.s32 %s314, 1
      %p318 = scmp.eq.s32.totalorder %s34, 1
      %p319 = scmp.ne.s32.totalorder %s314, %s316
      %p320 = scmp.eq.s32.totalorder %s34, 0
      %p321 = por %p319, %p320
      %p322 = scmp.ne.s32.totalorder %s314, %s316
      %p323 = scmp.eq.s32.totalorder %s39, 1
      %p324 = por %p322, %p323
      %p325 = scmp.ne.s32.totalorder %s316, %s317
      %p326 = scmp.eq.s32.totalorder %s39, 0
      %p327 = por %p325, %p326
      %p328 = scmp.ne.s32.totalorder %s316, %s317
      %p329 = scmp.eq.s32.totalorder %s40, 1
      %p330 = por %p328, %p329
      %p332 = scmp.ne.s32.totalorder %s317, %s331
      %p333 = scmp.eq.s32.totalorder %s40, 0
      %p334 = por %p332, %p333
      %s336 = sadd.s32 %s335, 1
      %p339 = scmp.eq.s32.totalorder %s34, 1
      %p340 = scmp.ne.s32.totalorder %s335, %s337
      %p341 = scmp.eq.s32.totalorder %s34, 0
      %p342 = por %p340, %p341
      %p343 = scmp.ne.s32.totalorder %s335, %s337
      %p344 = scmp.eq.s32.totalorder %s39, 1
      %p345 = por %p343, %p344
      %p346 = scmp.ne.s32.totalorder %s337, %s338
      %p347 = scmp.eq.s32.totalorder %s39, 0
      %p348 = por %p346, %p347
      %p349 = scmp.ne.s32.totalorder %s337, %s338
      %p350 = scmp.eq.s32.totalorder %s40, 1
      %p351 = por %p349, %p350
      %p353 = scmp.ne.s32.totalorder %s338, %s352
      %p354 = scmp.eq.s32.totalorder %s40, 0
      %p355 = por %p353, %p354
      %s356 = ssub.s32 %s34, %s41
      %p357 = scmp.eq.s32.totalorder %s356, 0
      %s359 = sadd.s32 %s358, 1
      %s360 = scalar_select %p357, %s358, %s359
      %p363 = pneg %p357
      %p364 = scmp.eq.s32.totalorder %s34, 1
      %p365 = por %p363, %p364
      %p366 = scmp.ne.s32.totalorder %s358, %s361
      %p367 = scmp.eq.s32.totalorder %s34, 0
      %p368 = por %p366, %p367
      %p369 = scmp.ne.s32.totalorder %s358, %s361
      %p370 = scmp.eq.s32.totalorder %s39, 1
      %p371 = por %p369, %p370
      %p372 = scmp.ne.s32.totalorder %s361, %s362
      %p373 = scmp.eq.s32.totalorder %s39, 0
      %p374 = por %p372, %p373
      %p375 = scmp.ne.s32.totalorder %s361, %s362
      %p376 = scmp.eq.s32.totalorder %s40, 1
      %p377 = por %p375, %p376
      %p379 = scmp.ne.s32.totalorder %s362, %s378
      %p380 = scmp.eq.s32.totalorder %s40, 0
      %p381 = por %p379, %p380
      %p382 = scmp.le.s32.totalorder 1, %s34
      %p383 = scmp.lt.s32.totalorder %s34, 3
      %p384 = pnand %p382, %p383
      %p385 = pneg %p384
      // Predicated region
      $region9: #{tpu_custom_call.1} parent=5 // pred_check
        _
      $region10: #{tpu_custom_call.1} parent=5 // pred_check_branch
        %387 = sbr.rel (%p384) target = $region12
      $region11: #{tpu_custom_call.1} parent=5 // pred_region
        %s388 = ssub.s32 %s34, 1
        // Predicated region
        $region13: #{tpu_custom_call.1} parent=11 // pred_check
          %p389 = pneg %p159
        $region14: #{tpu_custom_call.1} parent=11 // pred_check_branch
          %391 = sbr.rel (%p389) target = $region16
        $region15: #{tpu_custom_call.1} parent=11 // pred_region
          %s393 = ssub.s32 2048, 2048
          %394 = vsyncadd [#allocation9], %s393
          %s395 = sshll.u32 [#allocation10], 4
          %s396 = int_to_ptr.vmem [resolvable:$true] %s395
          %401 = dma.hbm_to_vmem [thread:$0]  %s4, 2048, %s396, [#allocation9], 128, 128, 8
        $region16: #{tpu_custom_call.1} parent=11 // pred_fallthru
          _
        // Predicated region
        $region17: #{tpu_custom_call.1} parent=11 // pred_check
          %p402 = pneg %p180
        $region18: #{tpu_custom_call.1} parent=11 // pred_check_branch
          %404 = sbr.rel (%p402) target = $region20
        $region19: #{tpu_custom_call.1} parent=11 // pred_region
          _
        $region20: #{tpu_custom_call.1} parent=11 // pred_fallthru
          _
        // Predicated region
        $region21: #{tpu_custom_call.1} parent=11 // pred_check
          %p405 = pneg %p201
        $region22: #{tpu_custom_call.1} parent=11 // pred_check_branch
          %407 = sbr.rel (%p405) target = $region24
        $region23: #{tpu_custom_call.1} parent=11 // pred_region
          %s409 = ssub.s32 2048, 2048
          %410 = vsyncadd [#allocation12], %s409
          %s411 = sshll.u32 [#allocation11], 4
          %s412 = int_to_ptr.vmem [resolvable:$true] %s411
          %417 = dma.hbm_to_vmem [thread:$0]  %s6, 2048, %s412, [#allocation12], 128, 128, 8
        $region24: #{tpu_custom_call.1} parent=11 // pred_fallthru
          _
        // Predicated region
        $region25: #{tpu_custom_call.1} parent=11 // pred_check
          %p418 = pneg %p222
        $region26: #{tpu_custom_call.1} parent=11 // pred_check_branch
          %420 = sbr.rel (%p418) target = $region28
        $region27: #{tpu_custom_call.1} parent=11 // pred_region
          _
        $region28: #{tpu_custom_call.1} parent=11 // pred_fallthru
          _
        // Predicated region
        $region29: #{tpu_custom_call.1} parent=11 // pred_check
          %p421 = pneg %p243
        $region30: #{tpu_custom_call.1} parent=11 // pred_check_branch
          %423 = sbr.rel (%p421) target = $region32
        $region31: #{tpu_custom_call.1} parent=11 // pred_region
          %s425 = ssub.s32 2048, 2048
          %426 = vsyncadd [#allocation12], %s425
          %s427 = sshll.u32 [#allocation13], 4
          %s428 = int_to_ptr.vmem [resolvable:$true] %s427
          %433 = dma.hbm_to_vmem [thread:$0]  %s8, 2048, %s428, [#allocation12], 128, 128, 8
        $region32: #{tpu_custom_call.1} parent=11 // pred_fallthru
          _
        // Predicated region
        $region33: #{tpu_custom_call.1} parent=11 // pred_check
          %p434 = pneg %p264
        $region34: #{tpu_custom_call.1} parent=11 // pred_check_branch
          %436 = sbr.rel (%p434) target = $region36
        $region35: #{tpu_custom_call.1} parent=11 // pred_region
          _
        $region36: #{tpu_custom_call.1} parent=11 // pred_fallthru
          _
        // Predicated region
        $region37: #{tpu_custom_call.1} parent=11 // pred_check
          %p437 = pneg %p285
        $region38: #{tpu_custom_call.1} parent=11 // pred_check_branch
          %439 = sbr.rel (%p437) target = $region40
        $region39: #{tpu_custom_call.1} parent=11 // pred_region
          %s441 = ssub.s32 2048, 2048
          %442 = vsyncadd [#allocation15], %s441
          %s443 = sshll.u32 [#allocation14], 4
          %s444 = int_to_ptr.vmem [resolvable:$true] %s443
          %449 = dma.hbm_to_vmem [thread:$0]  %s10, 2048, %s444, [#allocation15], 128, 128, 8
        $region40: #{tpu_custom_call.1} parent=11 // pred_fallthru
          _
        // Predicated region
        $region41: #{tpu_custom_call.1} parent=11 // pred_check
          %p450 = pneg %p306
        $region42: #{tpu_custom_call.1} parent=11 // pred_check_branch
          %452 = sbr.rel (%p450) target = $region44
        $region43: #{tpu_custom_call.1} parent=11 // pred_region
          _
        $region44: #{tpu_custom_call.1} parent=11 // pred_fallthru
          _
        // Predicated region
        $region45: #{tpu_custom_call.1} parent=11 // pred_check
          %p453 = pneg %p327
        $region46: #{tpu_custom_call.1} parent=11 // pred_check_branch
          %455 = sbr.rel (%p453) target = $region48
        $region47: #{tpu_custom_call.1} parent=11 // pred_region
          _
        $region48: #{tpu_custom_call.1} parent=11 // pred_fallthru
          _
        // Predicated region
        $region49: #{tpu_custom_call.1} parent=11 // pred_check
          %p456 = pneg %p348
        $region50: #{tpu_custom_call.1} parent=11 // pred_check_branch
          %458 = sbr.rel (%p456) target = $region52
        $region51: #{tpu_custom_call.1} parent=11 // pred_region
          _
        $region52: #{tpu_custom_call.1} parent=11 // pred_fallthru
          _
      $region12: #{tpu_custom_call.1} parent=5 // pred_fallthru
        _
      %p459 = scmp.lt.s32.totalorder %s34, 2
      // Predicated region
      $region53: #{tpu_custom_call.1} parent=5 // pred_check
        %p460 = pneg %p459
      $region54: #{tpu_custom_call.1} parent=5 // pred_check_branch
        %462 = sbr.rel (%p460) target = $region56
      $region55: #{tpu_custom_call.1} parent=5 // pred_region
        // Predicated region
        $region57: #{tpu_custom_call.1} parent=55 // pred_check
          %p463 = pneg %p54
        $region58: #{tpu_custom_call.1} parent=55 // pred_check_branch
          %465 = sbr.rel (%p463) target = $region60
        $region59: #{tpu_custom_call.1} parent=55 // pred_region
          %s466 = sand.u32 %s44, 1
          %s467 = scalar_lea.sflag [#allocation3], %s466
          %s468 = sand.u32 %s44, 1
          %s469 = smul.addr %s468, 16
          %s470 = scalar_lea.vmem [#allocation2], %s469
          %s472 = ssub.s32 256, 256
          %473 = vsyncadd %s467, %s472
          %s474 = smul.addr %s34, 2
          %s475 = smul.addr %s474, 128
          %s476 = scalar_lea.hbm %s0, %s475
          %s477 = sshll.u32 %s470, 4
          %s478 = int_to_ptr.vmem [resolvable:$true] %s477
          %483 = dma.hbm_to_vmem [thread:$0]  %s476, 256, %s478, %s467, 128, 128, 8
        $region60: #{tpu_custom_call.1} parent=55 // pred_fallthru
          _
        // Predicated region
        $region61: #{tpu_custom_call.1} parent=55 // pred_check
          %p484 = pneg %p80
        $region62: #{tpu_custom_call.1} parent=55 // pred_check_branch
          %486 = sbr.rel (%p484) target = $region64
        $region63: #{tpu_custom_call.1} parent=55 // pred_region
          %s487 = sand.u32 %s34, 1
          %s488 = scalar_lea.sflag [#allocation6], %s487
          %s489 = sand.u32 %s70, 1
          %s490 = smul.addr %s489, 16
          %s491 = scalar_lea.vmem [#allocation5], %s490
          %s493 = ssub.s32 256, 256
          %494 = vsyncadd %s488, %s493
          %s495 = smul.addr %s34, 2
          %s496 = smul.addr %s495, 128
          %s497 = scalar_lea.hbm %s1, %s496
          %s498 = sshll.u32 %s491, 4
          %s499 = int_to_ptr.vmem [resolvable:$true] %s498
          %504 = dma.hbm_to_vmem [thread:$0]  %s497, 256, %s499, %s488, 128, 128, 8
        $region64: #{tpu_custom_call.1} parent=55 // pred_fallthru
          _
        // Predicated region
        $region65: #{tpu_custom_call.1} parent=55 // pred_check
          %p505 = pneg %p106
        $region66: #{tpu_custom_call.1} parent=55 // pred_check_branch
          %507 = sbr.rel (%p505) target = $region68
        $region67: #{tpu_custom_call.1} parent=55 // pred_region
          %s508 = sand.u32 %s34, 1
          %s509 = scalar_lea.sflag [#allocation6], %s508
          %s510 = sand.u32 %s96, 1
          %s511 = smul.addr %s510, 16
          %s512 = scalar_lea.vmem [#allocation7], %s511
          %s514 = ssub.s32 256, 256
          %515 = vsyncadd %s509, %s514
          %s516 = smul.addr %s34, 2
          %s517 = smul.addr %s516, 128
          %s518 = scalar_lea.hbm %s2, %s517
          %s519 = sshll.u32 %s512, 4
          %s520 = int_to_ptr.vmem [resolvable:$true] %s519
          %525 = dma.hbm_to_vmem [thread:$0]  %s518, 256, %s520, %s509, 128, 128, 8
        $region68: #{tpu_custom_call.1} parent=55 // pred_fallthru
          _
        // Predicated region
        $region69: #{tpu_custom_call.1} parent=55 // pred_check
          %p526 = pneg %p132
        $region70: #{tpu_custom_call.1} parent=55 // pred_check_branch
          %528 = sbr.rel (%p526) target = $region72
        $region71: #{tpu_custom_call.1} parent=55 // pred_region
          %s529 = sand.u32 %s34, 1
          %s530 = scalar_lea.sflag [#allocation9], %s529
          %s531 = sand.u32 %s122, 1
          %s532 = smul.addr %s531, 16
          %s533 = scalar_lea.vmem [#allocation8], %s532
          %s535 = ssub.s32 256, 256
          %536 = vsyncadd %s530, %s535
          %s537 = smul.addr %s34, 2
          %s538 = smul.addr %s537, 128
          %s539 = scalar_lea.hbm %s3, %s538
          %s540 = sshll.u32 %s533, 4
          %s541 = int_to_ptr.vmem [resolvable:$true] %s540
          %546 = dma.hbm_to_vmem [thread:$0]  %s539, 256, %s541, %s530, 128, 128, 8
        $region72: #{tpu_custom_call.1} parent=55 // pred_fallthru
          _
      $region56: #{tpu_custom_call.1} parent=5 // pred_fallthru
        _
      %p547 = scmp.le.s32.totalorder 1, %s34
      %p548 = scmp.lt.s32.totalorder %s34, 3
      %p549 = pnand %p547, %p548
      %p550 = pneg %p549
      // Predicated region
      $region73: #{tpu_custom_call.1} parent=5 // pred_check
        _
      $region74: #{tpu_custom_call.1} parent=5 // pred_check_branch
        %552 = sbr.rel (%p549) target = $region76
      $region75: #{tpu_custom_call.1} parent=5 // pred_region
        %s553 = ssub.s32 %s34, 1
        %s554 = sand.u32 %s47, 1
        %s555 = scalar_lea.sflag [#allocation3], %s554
        %s556 = sand.u32 %s47, 1
        %s557 = smul.addr %s556, 16
        %s558 = scalar_lea.vmem [#allocation2], %s557
        // Predicated region
        $region77: #{tpu_custom_call.1} parent=75 // pred_check
          %p559 = pneg %p60
        $region78: #{tpu_custom_call.1} parent=75 // pred_check_branch
          %561 = sbr.rel (%p559) target = $region80
        $region79: #{tpu_custom_call.1} parent=75 // pred_region
          %562 = dma.done %s555, 256
        $region80: #{tpu_custom_call.1} parent=75 // pred_fallthru
          _
        %s563 = sand.u32 %s39, 1
        %s564 = scalar_lea.sflag [#allocation6], %s563
        %s565 = sand.u32 %s73, 1
        %s566 = smul.addr %s565, 16
        %s567 = scalar_lea.vmem [#allocation5], %s566
        // Predicated region
        $region81: #{tpu_custom_call.1} parent=75 // pred_check
          %p568 = pneg %p86
        $region82: #{tpu_custom_call.1} parent=75 // pred_check_branch
          %570 = sbr.rel (%p568) target = $region84
        $region83: #{tpu_custom_call.1} parent=75 // pred_region
          %571 = dma.done %s564, 256
        $region84: #{tpu_custom_call.1} parent=75 // pred_fallthru
          _
        %s572 = sand.u32 %s39, 1
        %s573 = scalar_lea.sflag [#allocation6], %s572
        %s574 = sand.u32 %s99, 1
        %s575 = smul.addr %s574, 16
        %s576 = scalar_lea.vmem [#allocation7], %s575
        // Predicated region
        $region85: #{tpu_custom_call.1} parent=75 // pred_check
          %p577 = pneg %p112
        $region86: #{tpu_custom_call.1} parent=75 // pred_check_branch
          %579 = sbr.rel (%p577) target = $region88
        $region87: #{tpu_custom_call.1} parent=75 // pred_region
          %580 = dma.done %s573, 256
        $region88: #{tpu_custom_call.1} parent=75 // pred_fallthru
          _
        %s581 = sand.u32 %s39, 1
        %s582 = scalar_lea.sflag [#allocation9], %s581
        %s583 = sand.u32 %s125, 1
        %s584 = smul.addr %s583, 16
        %s585 = scalar_lea.vmem [#allocation8], %s584
        // Predicated region
        $region89: #{tpu_custom_call.1} parent=75 // pred_check
          %p586 = pneg %p138
        $region90: #{tpu_custom_call.1} parent=75 // pred_check_branch
          %588 = sbr.rel (%p586) target = $region92
        $region91: #{tpu_custom_call.1} parent=75 // pred_region
          %589 = dma.done %s582, 256
        $region92: #{tpu_custom_call.1} parent=75 // pred_fallthru
          _
        // Predicated region
        $region93: #{tpu_custom_call.1} parent=75 // pred_check
          %p590 = pneg %p159
        $region94: #{tpu_custom_call.1} parent=75 // pred_check_branch
          %592 = sbr.rel (%p590) target = $region96
        $region95: #{tpu_custom_call.1} parent=75 // pred_region
          %593 = dma.done [#allocation9], 2048
        $region96: #{tpu_custom_call.1} parent=75 // pred_fallthru
          _
        // Predicated region
        $region97: #{tpu_custom_call.1} parent=75 // pred_check
          %p594 = pneg %p201
        $region98: #{tpu_custom_call.1} parent=75 // pred_check_branch
          %596 = sbr.rel (%p594) target = $region100
        $region99: #{tpu_custom_call.1} parent=75 // pred_region
          %597 = dma.done [#allocation12], 2048
        $region100: #{tpu_custom_call.1} parent=75 // pred_fallthru
          _
        // Predicated region
        $region101: #{tpu_custom_call.1} parent=75 // pred_check
          %p598 = pneg %p243
        $region102: #{tpu_custom_call.1} parent=75 // pred_check_branch
          %600 = sbr.rel (%p598) target = $region104
        $region103: #{tpu_custom_call.1} parent=75 // pred_region
          %601 = dma.done [#allocation12], 2048
        $region104: #{tpu_custom_call.1} parent=75 // pred_fallthru
          _
        // Predicated region
        $region105: #{tpu_custom_call.1} parent=75 // pred_check
          %p602 = pneg %p285
        $region106: #{tpu_custom_call.1} parent=75 // pred_check_branch
          %604 = sbr.rel (%p602) target = $region108
        $region107: #{tpu_custom_call.1} parent=75 // pred_region
          %605 = dma.done [#allocation15], 2048
        $region108: #{tpu_custom_call.1} parent=75 // pred_fallthru
          _
        %s606 = sand.u32 %s47, 1
        %s607 = scalar_lea.sflag [#allocation3], %s606
        %s608 = sand.u32 %s47, 1
        %s609 = smul.addr %s608, 16
        %s610 = scalar_lea.vmem [#allocation2], %s609
        %p611 = pneg %p60
        %p612 = pneg %p57
        %s613 = sand.u32 %s39, 1
        %s614 = scalar_lea.sflag [#allocation6], %s613
        %s615 = sand.u32 %s73, 1
        %s616 = smul.addr %s615, 16
        %s617 = scalar_lea.vmem [#allocation5], %s616
        %p618 = pneg %p86
        %p619 = pneg %p83
        %s620 = sand.u32 %s39, 1
        %s621 = scalar_lea.sflag [#allocation6], %s620
        %s622 = sand.u32 %s99, 1
        %s623 = smul.addr %s622, 16
        %s624 = scalar_lea.vmem [#allocation7], %s623
        %p625 = pneg %p112
        %p626 = pneg %p109
        %s627 = sand.u32 %s39, 1
        %s628 = scalar_lea.sflag [#allocation9], %s627
        %s629 = sand.u32 %s125, 1
        %s630 = smul.addr %s629, 16
        %s631 = scalar_lea.vmem [#allocation8], %s630
        %p632 = pneg %p138
        %p633 = pneg %p135
        %p634 = pneg %p159
        %p635 = pneg %p156
        %p636 = pneg %p180
        %p637 = pneg %p177
        %p638 = pneg %p201
        %p639 = pneg %p198
        %p640 = pneg %p222
        %p641 = pneg %p219
        %p642 = pneg %p243
        %p643 = pneg %p240
        %p644 = pneg %p264
        %p645 = pneg %p261
        %p646 = pneg %p285
        %p647 = pneg %p282
        %p648 = pneg %p306
        %p649 = pneg %p303
        %p650 = pneg %p327
        %p651 = pneg %p324
        %p652 = pneg %p348
        %p653 = pneg %p345
        %p654 = pneg %p374
        %p655 = pneg %p371
        %s656 = sand.u32 %s361, 1
        %s657 = scalar_lea.sflag [#allocation4], %s656
        %s658 = sand.u32 %s361, 1
        %s659 = smul.addr %s658, 16
        %s660 = scalar_lea.vmem [#allocation16], %s659
        %v661 = vld [vmem:[%s558] sm:$0xff]
        %v662 = vld [vmem:[%s558 + $0x8] sm:$0xff]
        %v663 = vld [vmem:[%s567] sm:$0xff]
        %v664 = vld [vmem:[%s567 + $0x8] sm:$0xff]
        %v665 = vld [vmem:[%s576] sm:$0xff]
        %v666 = vld [vmem:[%s576 + $0x8] sm:$0xff]
        %v667 = vld [vmem:[%s585] sm:$0xff]
        %v668 = vld [vmem:[%s585 + $0x8] sm:$0xff]
        %vm669 = vcmp.gt.f32.partialorder %v667, 0.5
        %vm670 = vcmp.gt.f32.partialorder %v668, 0.5
        %v671 = vsel %vm669, -1e+09, 0.0
        %v672 = vsel %vm670, -1e+09, 0.0
        %v673 = vld [vmem:[#allocation10] sm:$0xff]
        %v674 = vld [vmem:[#allocation10 + $0x8] sm:$0xff]
        %v675 = vld [vmem:[#allocation10 + $0x10] sm:$0xff]
        %v676 = vld [vmem:[#allocation10 + $0x18] sm:$0xff]
        %v677 = vld [vmem:[#allocation10 + $0x20] sm:$0xff]
        %v678 = vld [vmem:[#allocation10 + $0x28] sm:$0xff]
        %v679 = vld [vmem:[#allocation10 + $0x30] sm:$0xff]
        %v680 = vld [vmem:[#allocation10 + $0x38] sm:$0xff]
        %v681 = vld [vmem:[#allocation10 + $0x40] sm:$0xff]
        %v682 = vld [vmem:[#allocation10 + $0x48] sm:$0xff]
        %v683 = vld [vmem:[#allocation10 + $0x50] sm:$0xff]
        %v684 = vld [vmem:[#allocation10 + $0x58] sm:$0xff]
        %v685 = vld [vmem:[#allocation10 + $0x60] sm:$0xff]
        %v686 = vld [vmem:[#allocation10 + $0x68] sm:$0xff]
        %v687 = vld [vmem:[#allocation10 + $0x70] sm:$0xff]
        %v688 = vld [vmem:[#allocation10 + $0x78] sm:$0xff]
        %v689 = vld [vmem:[%s5] sm:$0x1]
        %v691 = vlaneseq
        %v692 = vshrl.u32 %v691, 7
        %v693 = vsub.s32 0, %v692
        %v694 = vrot.slane %v689, %v693
        %696 = vmatprep.subr.mxu0 0.0
        %697 = vmatpush1.msra.mxu0 %v673
        %698 = vmatprep.subr.mxu0 0.0
        %699 = vmatpush1.msra.mxu0 %v674
        %700 = vmatprep.subr.mxu0 0.0
        %701 = vmatpush1.msra.mxu0 %v675
        %702 = vmatprep.subr.mxu0 0.0
        %703 = vmatpush1.msra.mxu0 %v676
        %704 = vmatprep.subr.mxu0 0.0
        %705 = vmatpush1.msra.mxu0 %v677
        %706 = vmatprep.subr.mxu0 0.0
        %707 = vmatpush1.msra.mxu0 %v678
        %708 = vmatprep.subr.mxu0 0.0
        %709 = vmatpush1.msra.mxu0 %v679
        %710 = vmatprep.subr.mxu0 0.0
        %711 = vmatpush1.msra.mxu0 %v680
        %712 = vmatprep.subr.mxu0 0.0
        %713 = vmatpush1.msra.mxu0 %v681
        %714 = vmatprep.subr.mxu0 0.0
        %715 = vmatpush1.msra.mxu0 %v682
        %716 = vmatprep.subr.mxu0 0.0
        %717 = vmatpush1.msra.mxu0 %v683
        %718 = vmatprep.subr.mxu0 0.0
        %719 = vmatpush1.msra.mxu0 %v684
        %720 = vmatprep.subr.mxu0 0.0
        %721 = vmatpush1.msra.mxu0 %v685
        %722 = vmatprep.subr.mxu0 0.0
        %723 = vmatpush1.msra.mxu0 %v686
        %724 = vmatprep.subr.mxu0 0.0
        %725 = vmatpush1.msra.mxu0 %v687
        %726 = vmatprep.subr.mxu0 0.0
        %727 = vmatpush1.msra.mxu0 %v688
        %728 = vmatprep.subr.mxu0 0.0
        %729 = vmatpush1.msra.mxu0 0.0
        %730 = vmatprep.subr.mxu0 0.0
        %731 = vmatpush1.msra.mxu0 0.0
        %732 = vmatprep.subr.mxu0 0.0
        %733 = vmatpush1.msra.mxu0 0.0
        %734 = vmatprep.subr.mxu0 0.0
        %735 = vmatpush1.msra.mxu0 0.0
        %736 = vmatprep.subr.mxu0 0.0
        %737 = vmatpush1.msra.mxu0 0.0
        %738 = vmatprep.subr.mxu0 0.0
        %739 = vmatpush1.msra.mxu0 0.0
        %740 = vmatprep.subr.mxu0 0.0
        %741 = vmatpush1.msra.mxu0 0.0
        %742 = vmatprep.subr.mxu0 0.0
        %743 = vmatpush1.msra.mxu0 0.0
        %744 = vmatprep.subr.mxu0 0.0
        %745 = vmatpush1.msra.mxu0 0.0
        %746 = vmatprep.subr.mxu0 0.0
        %747 = vmatpush1.msra.mxu0 0.0
        %748 = vmatprep.subr.mxu0 0.0
        %749 = vmatpush1.msra.mxu0 0.0
        %750 = vmatprep.subr.mxu0 0.0
        %751 = vmatpush1.msra.mxu0 0.0
        %752 = vmatprep.subr.mxu0 0.0
        %753 = vmatpush1.msra.mxu0 0.0
        %754 = vmatprep.subr.mxu0 0.0
        %755 = vmatpush1.msra.mxu0 0.0
        %756 = vmatprep.subr.mxu0 0.0
        %757 = vmatpush1.msra.mxu0 0.0
        %758 = vmatprep.subr.mxu0 0.0
        %759 = vmatpush1.msra.mxu0 0.0
        %760 = vmatprep.mubr.f32.mxu0 0.0
        %761 = vmatmul.mubr.f32.gmra.mrb[0].mxu0 %v661
        %v762 = vpop.f32.mrb[0].mxu0
        %v763 = vadd.f32 %v694, %v762
        %v764 = vpop.f32.mrb[0].mxu0
        %765 = vmatprep.mubr.f32.mxu0 0.0
        %766 = vmatmul.mubr.f32.gmra.mrb[0].mxu0 %v662
        %v767 = vpop.f32.mrb[0].mxu0
        %v768 = vadd.f32 %v694, %v767
        %v769 = vpop.f32.mrb[0].mxu0
        %770 = vdwg.mxu0
        %v771 = vld [vmem:[#allocation11] sm:$0xff]
        %v772 = vld [vmem:[#allocation11 + $0x8] sm:$0xff]
        %v773 = vld [vmem:[#allocation11 + $0x10] sm:$0xff]
        %v774 = vld [vmem:[#allocation11 + $0x18] sm:$0xff]
        %v775 = vld [vmem:[#allocation11 + $0x20] sm:$0xff]
        %v776 = vld [vmem:[#allocation11 + $0x28] sm:$0xff]
        %v777 = vld [vmem:[#allocation11 + $0x30] sm:$0xff]
        %v778 = vld [vmem:[#allocation11 + $0x38] sm:$0xff]
        %v779 = vld [vmem:[#allocation11 + $0x40] sm:$0xff]
        %v780 = vld [vmem:[#allocation11 + $0x48] sm:$0xff]
        %v781 = vld [vmem:[#allocation11 + $0x50] sm:$0xff]
        %v782 = vld [vmem:[#allocation11 + $0x58] sm:$0xff]
        %v783 = vld [vmem:[#allocation11 + $0x60] sm:$0xff]
        %v784 = vld [vmem:[#allocation11 + $0x68] sm:$0xff]
        %v785 = vld [vmem:[#allocation11 + $0x70] sm:$0xff]
        %v786 = vld [vmem:[#allocation11 + $0x78] sm:$0xff]
        %v787 = vld [vmem:[%s7] sm:$0x1]
        %v789 = vlaneseq
        %v790 = vshrl.u32 %v789, 7
        %v791 = vsub.s32 0, %v790
        %v792 = vrot.slane %v787, %v791
        %794 = vmatprep.subr.mxu0 0.0
        %795 = vmatpush1.msra.mxu0 %v771
        %796 = vmatprep.subr.mxu0 0.0
        %797 = vmatpush1.msra.mxu0 %v772
        %798 = vmatprep.subr.mxu0 0.0
        %799 = vmatpush1.msra.mxu0 %v773
        %800 = vmatprep.subr.mxu0 0.0
        %801 = vmatpush1.msra.mxu0 %v774
        %802 = vmatprep.subr.mxu0 0.0
        %803 = vmatpush1.msra.mxu0 %v775
        %804 = vmatprep.subr.mxu0 0.0
        %805 = vmatpush1.msra.mxu0 %v776
        %806 = vmatprep.subr.mxu0 0.0
        %807 = vmatpush1.msra.mxu0 %v777
        %808 = vmatprep.subr.mxu0 0.0
        %809 = vmatpush1.msra.mxu0 %v778
        %810 = vmatprep.subr.mxu0 0.0
        %811 = vmatpush1.msra.mxu0 %v779
        %812 = vmatprep.subr.mxu0 0.0
        %813 = vmatpush1.msra.mxu0 %v780
        %814 = vmatprep.subr.mxu0 0.0
        %815 = vmatpush1.msra.mxu0 %v781
        %816 = vmatprep.subr.mxu0 0.0
        %817 = vmatpush1.msra.mxu0 %v782
        %818 = vmatprep.subr.mxu0 0.0
        %819 = vmatpush1.msra.mxu0 %v783
        %820 = vmatprep.subr.mxu0 0.0
        %821 = vmatpush1.msra.mxu0 %v784
        %822 = vmatprep.subr.mxu0 0.0
        %823 = vmatpush1.msra.mxu0 %v785
        %824 = vmatprep.subr.mxu0 0.0
        %825 = vmatpush1.msra.mxu0 %v786
        %826 = vmatprep.subr.mxu0 0.0
        %827 = vmatpush1.msra.mxu0 0.0
        %828 = vmatprep.subr.mxu0 0.0
        %829 = vmatpush1.msra.mxu0 0.0
        %830 = vmatprep.subr.mxu0 0.0
        %831 = vmatpush1.msra.mxu0 0.0
        %832 = vmatprep.subr.mxu0 0.0
        %833 = vmatpush1.msra.mxu0 0.0
        %834 = vmatprep.subr.mxu0 0.0
        %835 = vmatpush1.msra.mxu0 0.0
        %836 = vmatprep.subr.mxu0 0.0
        %837 = vmatpush1.msra.mxu0 0.0
        %838 = vmatprep.subr.mxu0 0.0
        %839 = vmatpush1.msra.mxu0 0.0
        %840 = vmatprep.subr.mxu0 0.0
        %841 = vmatpush1.msra.mxu0 0.0
        %842 = vmatprep.subr.mxu0 0.0
        %843 = vmatpush1.msra.mxu0 0.0
        %844 = vmatprep.subr.mxu0 0.0
        %845 = vmatpush1.msra.mxu0 0.0
        %846 = vmatprep.subr.mxu0 0.0
        %847 = vmatpush1.msra.mxu0 0.0
        %848 = vmatprep.subr.mxu0 0.0
        %849 = vmatpush1.msra.mxu0 0.0
        %850 = vmatprep.subr.mxu0 0.0
        %851 = vmatpush1.msra.mxu0 0.0
        %852 = vmatprep.subr.mxu0 0.0
        %853 = vmatpush1.msra.mxu0 0.0
        %854 = vmatprep.subr.mxu0 0.0
        %855 = vmatpush1.msra.mxu0 0.0
        %856 = vmatprep.subr.mxu0 0.0
        %857 = vmatpush1.msra.mxu0 0.0
        %858 = vmatprep.mubr.f32.mxu0 0.0
        %859 = vmatmul.mubr.f32.gmra.mrb[0].mxu0 %v663
        %v860 = vpop.f32.mrb[0].mxu0
        %v861 = vadd.f32 %v792, %v860
        %v862 = vpop.f32.mrb[0].mxu0
        %863 = vmatprep.mubr.f32.mxu0 0.0
        %864 = vmatmul.mubr.f32.gmra.mrb[0].mxu0 %v664
        %v865 = vpop.f32.mrb[0].mxu0
        %v866 = vadd.f32 %v792, %v865
        %v867 = vpop.f32.mrb[0].mxu0
        %868 = vdwg.mxu0
        %v869 = vld [vmem:[#allocation13] sm:$0xff]
        %v870 = vld [vmem:[#allocation13 + $0x8] sm:$0xff]
        %v871 = vld [vmem:[#allocation13 + $0x10] sm:$0xff]
        %v872 = vld [vmem:[#allocation13 + $0x18] sm:$0xff]
        %v873 = vld [vmem:[#allocation13 + $0x20] sm:$0xff]
        %v874 = vld [vmem:[#allocation13 + $0x28] sm:$0xff]
        %v875 = vld [vmem:[#allocation13 + $0x30] sm:$0xff]
        %v876 = vld [vmem:[#allocation13 + $0x38] sm:$0xff]
        %v877 = vld [vmem:[#allocation13 + $0x40] sm:$0xff]
        %v878 = vld [vmem:[#allocation13 + $0x48] sm:$0xff]
        %v879 = vld [vmem:[#allocation13 + $0x50] sm:$0xff]
        %v880 = vld [vmem:[#allocation13 + $0x58] sm:$0xff]
        %v881 = vld [vmem:[#allocation13 + $0x60] sm:$0xff]
        %v882 = vld [vmem:[#allocation13 + $0x68] sm:$0xff]
        %v883 = vld [vmem:[#allocation13 + $0x70] sm:$0xff]
        %v884 = vld [vmem:[#allocation13 + $0x78] sm:$0xff]
        %v885 = vld [vmem:[%s9] sm:$0x1]
        %v887 = vlaneseq
        %v888 = vshrl.u32 %v887, 7
        %v889 = vsub.s32 0, %v888
        %v890 = vrot.slane %v885, %v889
        %892 = vmatprep.subr.mxu0 0.0
        %893 = vmatpush1.msra.mxu0 %v869
        %894 = vmatprep.subr.mxu0 0.0
        %895 = vmatpush1.msra.mxu0 %v870
        %896 = vmatprep.subr.mxu0 0.0
        %897 = vmatpush1.msra.mxu0 %v871
        %898 = vmatprep.subr.mxu0 0.0
        %899 = vmatpush1.msra.mxu0 %v872
        %900 = vmatprep.subr.mxu0 0.0
        %901 = vmatpush1.msra.mxu0 %v873
        %902 = vmatprep.subr.mxu0 0.0
        %903 = vmatpush1.msra.mxu0 %v874
        %904 = vmatprep.subr.mxu0 0.0
        %905 = vmatpush1.msra.mxu0 %v875
        %906 = vmatprep.subr.mxu0 0.0
        %907 = vmatpush1.msra.mxu0 %v876
        %908 = vmatprep.subr.mxu0 0.0
        %909 = vmatpush1.msra.mxu0 %v877
        %910 = vmatprep.subr.mxu0 0.0
        %911 = vmatpush1.msra.mxu0 %v878
        %912 = vmatprep.subr.mxu0 0.0
        %913 = vmatpush1.msra.mxu0 %v879
        %914 = vmatprep.subr.mxu0 0.0
        %915 = vmatpush1.msra.mxu0 %v880
        %916 = vmatprep.subr.mxu0 0.0
        %917 = vmatpush1.msra.mxu0 %v881
        %918 = vmatprep.subr.mxu0 0.0
        %919 = vmatpush1.msra.mxu0 %v882
        %920 = vmatprep.subr.mxu0 0.0
        %921 = vmatpush1.msra.mxu0 %v883
        %922 = vmatprep.subr.mxu0 0.0
        %923 = vmatpush1.msra.mxu0 %v884
        %924 = vmatprep.subr.mxu0 0.0
        %925 = vmatpush1.msra.mxu0 0.0
        %926 = vmatprep.subr.mxu0 0.0
        %927 = vmatpush1.msra.mxu0 0.0
        %928 = vmatprep.subr.mxu0 0.0
        %929 = vmatpush1.msra.mxu0 0.0
        %930 = vmatprep.subr.mxu0 0.0
        %931 = vmatpush1.msra.mxu0 0.0
        %932 = vmatprep.subr.mxu0 0.0
        %933 = vmatpush1.msra.mxu0 0.0
        %934 = vmatprep.subr.mxu0 0.0
        %935 = vmatpush1.msra.mxu0 0.0
        %936 = vmatprep.subr.mxu0 0.0
        %937 = vmatpush1.msra.mxu0 0.0
        %938 = vmatprep.subr.mxu0 0.0
        %939 = vmatpush1.msra.mxu0 0.0
        %940 = vmatprep.subr.mxu0 0.0
        %941 = vmatpush1.msra.mxu0 0.0
        %942 = vmatprep.subr.mxu0 0.0
        %943 = vmatpush1.msra.mxu0 0.0
        %944 = vmatprep.subr.mxu0 0.0
        %945 = vmatpush1.msra.mxu0 0.0
        %946 = vmatprep.subr.mxu0 0.0
        %947 = vmatpush1.msra.mxu0 0.0
        %948 = vmatprep.subr.mxu0 0.0
        %949 = vmatpush1.msra.mxu0 0.0
        %950 = vmatprep.subr.mxu0 0.0
        %951 = vmatpush1.msra.mxu0 0.0
        %952 = vmatprep.subr.mxu0 0.0
        %953 = vmatpush1.msra.mxu0 0.0
        %954 = vmatprep.subr.mxu0 0.0
        %955 = vmatpush1.msra.mxu0 0.0
        %956 = vmatprep.mubr.f32.mxu0 0.0
        %957 = vmatmul.mubr.f32.gmra.mrb[0].mxu0 %v665
        %v958 = vpop.f32.mrb[0].mxu0
        %v959 = vadd.f32 %v890, %v958
        %v960 = vpop.f32.mrb[0].mxu0
        %961 = vmatprep.mubr.f32.mxu0 0.0
        %962 = vmatmul.mubr.f32.gmra.mrb[0].mxu0 %v666
        %v963 = vpop.f32.mrb[0].mxu0
        %v964 = vadd.f32 %v890, %v963
        %v965 = vpop.f32.mrb[0].mxu0
        %966 = vdwg.mxu0
        %v967 = vmul.f32 %v763, 0.17677669
        %v968 = vmul.f32 %v768, 0.17677669
        %v969 = vld [vmem:[%s11] sm:$0x1]
        %v971 = vlaneseq
        %v972 = vshrl.u32 %v971, 7
        %v973 = vsub.s32 0, %v972
        %v974 = vrot.slane %v969, %v973
        %v976 = vadd.f32 %v661, %v974
        %v977 = vadd.f32 %v662, %v974
        %vm978 = vcmask 261120
        %v980 = vsel %vm978, %v967, 0
        %v983 = vsel %vm978, %v968, 0
        %v986 = vsel %vm978, %v861, 0
        %v989 = vsel %vm978, %v866, 0
        %991 = vmatprep.subr.mxu0 0.0
        %992 = vmatpush1.xpose.msra.mxu0 %v986
        %993 = vmatprep.subr.mxu0 0.0
        %994 = vmatpush1.xpose.msra.mxu0 %v989
        %995 = vmatprep.subr.mxu0 0.0
        %996 = vmatpush1.xpose.msra.mxu0 0.0
        %997 = vmatprep.subr.mxu0 0.0
        %998 = vmatpush1.xpose.msra.mxu0 0.0
        %999 = vmatprep.subr.mxu0 0.0
        %1000 = vmatpush1.xpose.msra.mxu0 0.0
        %1001 = vmatprep.subr.mxu0 0.0
        %1002 = vmatpush1.xpose.msra.mxu0 0.0
        %1003 = vmatprep.subr.mxu0 0.0
        %1004 = vmatpush1.xpose.msra.mxu0 0.0
        %1005 = vmatprep.subr.mxu0 0.0
        %1006 = vmatpush1.xpose.msra.mxu0 0.0
        %1007 = vmatprep.subr.mxu0 0.0
        %1008 = vmatpush1.xpose.msra.mxu0 0.0
        %1009 = vmatprep.subr.mxu0 0.0
        %1010 = vmatpush1.xpose.msra.mxu0 0.0
        %1011 = vmatprep.subr.mxu0 0.0
        %1012 = vmatpush1.xpose.msra.mxu0 0.0
        %1013 = vmatprep.subr.mxu0 0.0
        %1014 = vmatpush1.xpose.msra.mxu0 0.0
        %1015 = vmatprep.subr.mxu0 0.0
        %1016 = vmatpush1.xpose.msra.mxu0 0.0
        %1017 = vmatprep.subr.mxu0 0.0
        %1018 = vmatpush1.xpose.msra.mxu0 0.0
        %1019 = vmatprep.subr.mxu0 0.0
        %1020 = vmatpush1.xpose.msra.mxu0 0.0
        %1021 = vmatprep.subr.mxu0 0.0
        %1022 = vmatpush1.xpose.msra.mxu0 0.0
        %1023 = vmatprep.subr.mxu0 0.0
        %1024 = vmatpush1.xpose.msra.mxu0 0.0
        %1025 = vmatprep.subr.mxu0 0.0
        %1026 = vmatpush1.xpose.msra.mxu0 0.0
        %1027 = vmatprep.subr.mxu0 0.0
        %1028 = vmatpush1.xpose.msra.mxu0 0.0
        %1029 = vmatprep.subr.mxu0 0.0
        %1030 = vmatpush1.xpose.msra.mxu0 0.0
        %1031 = vmatprep.subr.mxu0 0.0
        %1032 = vmatpush1.xpose.msra.mxu0 0.0
        %1033 = vmatprep.subr.mxu0 0.0
        %1034 = vmatpush1.xpose.msra.mxu0 0.0
        %1035 = vmatprep.subr.mxu0 0.0
        %1036 = vmatpush1.xpose.msra.mxu0 0.0
        %1037 = vmatprep.subr.mxu0 0.0
        %1038 = vmatpush1.xpose.msra.mxu0 0.0
        %1039 = vmatprep.subr.mxu0 0.0
        %1040 = vmatpush1.xpose.msra.mxu0 0.0
        %1041 = vmatprep.subr.mxu0 0.0
        %1042 = vmatpush1.xpose.msra.mxu0 0.0
        %1043 = vmatprep.subr.mxu0 0.0
        %1044 = vmatpush1.xpose.msra.mxu0 0.0
        %1045 = vmatprep.subr.mxu0 0.0
        %1046 = vmatpush1.xpose.msra.mxu0 0.0
        %1047 = vmatprep.subr.mxu0 0.0
        %1048 = vmatpush1.xpose.msra.mxu0 0.0
        %1049 = vmatprep.subr.mxu0 0.0
        %1050 = vmatpush1.xpose.msra.mxu0 0.0
        %1051 = vmatprep.subr.mxu0 0.0
        %1052 = vmatpush1.xpose.msra.mxu0 0.0
        %1053 = vmatprep.subr.mxu0 0.0
        %1054 = vmatpush1.xpose.msra.mxu0 0.0
        %1055 = vmatprep.mubr.f32.mxu0 0.0
        %1056 = vmatmul.mubr.f32.gmra.mrb[0].mxu0 %v980
        %v1057 = vpop.f32.mrb[0].mxu0
        %v1058 = vadd.f32 %v671, %v1057
        %v1059 = vpop.f32.mrb[0].mxu0
        %1060 = vmatprep.mubr.f32.mxu0 0.0
        %1061 = vmatmul.mubr.f32.gmra.mrb[0].mxu0 %v983
        %v1062 = vpop.f32.mrb[0].mxu0
        %v1063 = vadd.f32 %v672, %v1062
        %v1064 = vpop.f32.mrb[0].mxu0
        %1065 = vdwg.mxu0
        %vm1066 = vcmask 130048
        %v1067 = vsel %vm1066, %v1058, -inf
        %1068 = vmax.xlane.f32.xlu0 %v1067
        %v1069 = vpop.xlane.xlu0 %1068
        %v1070 = vsel %vm1066, %v1063, -inf
        %1071 = vmax.xlane.f32.xlu0 %v1070
        %v1072 = vpop.xlane.xlu0 %1071
        %v1073 = vsub.f32 %v1058, %v1069
        %v1074 = vsub.f32 %v1063, %v1072
        %v1075 = vmul.f32 %v1073, 1.442695
        %v1076 = vpow.pop %v1075
        %v1077 = vmul.f32 %v1074, 1.442695
        %v1078 = vpow.pop %v1077
        %v1079 = vsel %vm1066, %v1076, 0.0
        %1080 = vadd.xlane.f32.xlu0 %v1079
        %v1081 = vpop.xlane.xlu0 %1080
        %v1082 = vsel %vm1066, %v1078, 0.0
        %1083 = vadd.xlane.f32.xlu0 %v1082
        %v1084 = vpop.xlane.xlu0 %1083
        %v1085 = vrcp.pop %v1081
        %v1086 = vrcp.pop %v1084
        %v1087 = vmul.f32 %v1076, %v1085
        %v1088 = vmul.f32 %v1078, %v1086
        %v1090 = vsel %vm1066, %v1087, 0
        %v1093 = vsel %vm1066, %v1088, 0
        %1095 = vmatprep.subr.mxu0 0.0
        %1096 = vmatpush1.msra.mxu0 %v959
        %1097 = vmatprep.subr.mxu0 0.0
        %1098 = vmatpush1.msra.mxu0 %v964
        %1099 = vmatprep.subr.mxu0 0.0
        %1100 = vmatpush1.msra.mxu0 0.0
        %1101 = vmatprep.subr.mxu0 0.0
        %1102 = vmatpush1.msra.mxu0 0.0
        %1103 = vmatprep.subr.mxu0 0.0
        %1104 = vmatpush1.msra.mxu0 0.0
        %1105 = vmatprep.subr.mxu0 0.0
        %1106 = vmatpush1.msra.mxu0 0.0
        %1107 = vmatprep.subr.mxu0 0.0
        %1108 = vmatpush1.msra.mxu0 0.0
        %1109 = vmatprep.subr.mxu0 0.0
        %1110 = vmatpush1.msra.mxu0 0.0
        %1111 = vmatprep.subr.mxu0 0.0
        %1112 = vmatpush1.msra.mxu0 0.0
        %1113 = vmatprep.subr.mxu0 0.0
        %1114 = vmatpush1.msra.mxu0 0.0
        %1115 = vmatprep.subr.mxu0 0.0
        %1116 = vmatpush1.msra.mxu0 0.0
        %1117 = vmatprep.subr.mxu0 0.0
        %1118 = vmatpush1.msra.mxu0 0.0
        %1119 = vmatprep.subr.mxu0 0.0
        %1120 = vmatpush1.msra.mxu0 0.0
        %1121 = vmatprep.subr.mxu0 0.0
        %1122 = vmatpush1.msra.mxu0 0.0
        %1123 = vmatprep.subr.mxu0 0.0
        %1124 = vmatpush1.msra.mxu0 0.0
        %1125 = vmatprep.subr.mxu0 0.0
        %1126 = vmatpush1.msra.mxu0 0.0
        %1127 = vmatprep.subr.mxu0 0.0
        %1128 = vmatpush1.msra.mxu0 0.0
        %1129 = vmatprep.subr.mxu0 0.0
        %1130 = vmatpush1.msra.mxu0 0.0
        %1131 = vmatprep.subr.mxu0 0.0
        %1132 = vmatpush1.msra.mxu0 0.0
        %1133 = vmatprep.subr.mxu0 0.0
        %1134 = vmatpush1.msra.mxu0 0.0
        %1135 = vmatprep.subr.mxu0 0.0
        %1136 = vmatpush1.msra.mxu0 0.0
        %1137 = vmatprep.subr.mxu0 0.0
        %1138 = vmatpush1.msra.mxu0 0.0
        %1139 = vmatprep.subr.mxu0 0.0
        %1140 = vmatpush1.msra.mxu0 0.0
        %1141 = vmatprep.subr.mxu0 0.0
        %1142 = vmatpush1.msra.mxu0 0.0
        %1143 = vmatprep.subr.mxu0 0.0
        %1144 = vmatpush1.msra.mxu0 0.0
        %1145 = vmatprep.subr.mxu0 0.0
        %1146 = vmatpush1.msra.mxu0 0.0
        %1147 = vmatprep.subr.mxu0 0.0
        %1148 = vmatpush1.msra.mxu0 0.0
        %1149 = vmatprep.subr.mxu0 0.0
        %1150 = vmatpush1.msra.mxu0 0.0
        %1151 = vmatprep.subr.mxu0 0.0
        %1152 = vmatpush1.msra.mxu0 0.0
        %1153 = vmatprep.subr.mxu0 0.0
        %1154 = vmatpush1.msra.mxu0 0.0
        %1155 = vmatprep.subr.mxu0 0.0
        %1156 = vmatpush1.msra.mxu0 0.0
        %1157 = vmatprep.subr.mxu0 0.0
        %1158 = vmatpush1.msra.mxu0 0.0
        %1159 = vmatprep.mubr.f32.mxu0 0.0
        %1160 = vmatmul.mubr.f32.gmra.mrb[0].mxu0 %v1090
        %v1161 = vpop.f32.mrb[0].mxu0
        %v1162 = vadd.f32 0.0, %v1161
        %v1163 = vpop.f32.mrb[0].mxu0
        %1164 = vmatprep.mubr.f32.mxu0 0.0
        %1165 = vmatmul.mubr.f32.gmra.mrb[0].mxu0 %v1093
        %v1166 = vpop.f32.mrb[0].mxu0
        %v1167 = vadd.f32 0.0, %v1166
        %v1168 = vpop.f32.mrb[0].mxu0
        %1169 = vdwg.mxu0
        %v1170 = vld [vmem:[#allocation14] sm:$0xff]
        %v1171 = vld [vmem:[#allocation14 + $0x8] sm:$0xff]
        %v1172 = vld [vmem:[#allocation14 + $0x10] sm:$0xff]
        %v1173 = vld [vmem:[#allocation14 + $0x18] sm:$0xff]
        %v1175 = vsel %vm978, %v1162, 0
        %v1178 = vsel %vm978, %v1167, 0
        %1180 = vmatprep.subr.mxu0 0.0
        %1181 = vmatpush1.msra.mxu0 %v1170
        %1182 = vmatprep.subr.mxu0 0.0
        %1183 = vmatpush1.msra.mxu0 %v1171
        %1184 = vmatprep.subr.mxu0 0.0
        %1185 = vmatpush1.msra.mxu0 %v1172
        %1186 = vmatprep.subr.mxu0 0.0
        %1187 = vmatpush1.msra.mxu0 %v1173
        %1188 = vmatprep.subr.mxu0 0.0
        %1189 = vmatpush1.msra.mxu0 0.0
        %1190 = vmatprep.subr.mxu0 0.0
        %1191 = vmatpush1.msra.mxu0 0.0
        %1192 = vmatprep.subr.mxu0 0.0
        %1193 = vmatpush1.msra.mxu0 0.0
        %1194 = vmatprep.subr.mxu0 0.0
        %1195 = vmatpush1.msra.mxu0 0.0
        %1196 = vmatprep.subr.mxu0 0.0
        %1197 = vmatpush1.msra.mxu0 0.0
        %1198 = vmatprep.subr.mxu0 0.0
        %1199 = vmatpush1.msra.mxu0 0.0
        %1200 = vmatprep.subr.mxu0 0.0
        %1201 = vmatpush1.msra.mxu0 0.0
        %1202 = vmatprep.subr.mxu0 0.0
        %1203 = vmatpush1.msra.mxu0 0.0
        %1204 = vmatprep.subr.mxu0 0.0
        %1205 = vmatpush1.msra.mxu0 0.0
        %1206 = vmatprep.subr.mxu0 0.0
        %1207 = vmatpush1.msra.mxu0 0.0
        %1208 = vmatprep.subr.mxu0 0.0
        %1209 = vmatpush1.msra.mxu0 0.0
        %1210 = vmatprep.subr.mxu0 0.0
        %1211 = vmatpush1.msra.mxu0 0.0
        %1212 = vmatprep.subr.mxu0 0.0
        %1213 = vmatpush1.msra.mxu0 0.0
        %1214 = vmatprep.subr.mxu0 0.0
        %1215 = vmatpush1.msra.mxu0 0.0
        %1216 = vmatprep.subr.mxu0 0.0
        %1217 = vmatpush1.msra.mxu0 0.0
        %1218 = vmatprep.subr.mxu0 0.0
        %1219 = vmatpush1.msra.mxu0 0.0
        %1220 = vmatprep.subr.mxu0 0.0
        %1221 = vmatpush1.msra.mxu0 0.0
        %1222 = vmatprep.subr.mxu0 0.0
        %1223 = vmatpush1.msra.mxu0 0.0
        %1224 = vmatprep.subr.mxu0 0.0
        %1225 = vmatpush1.msra.mxu0 0.0
        %1226 = vmatprep.subr.mxu0 0.0
        %1227 = vmatpush1.msra.mxu0 0.0
        %1228 = vmatprep.subr.mxu0 0.0
        %1229 = vmatpush1.msra.mxu0 0.0
        %1230 = vmatprep.subr.mxu0 0.0
        %1231 = vmatpush1.msra.mxu0 0.0
        %1232 = vmatprep.subr.mxu0 0.0
        %1233 = vmatpush1.msra.mxu0 0.0
        %1234 = vmatprep.subr.mxu0 0.0
        %1235 = vmatpush1.msra.mxu0 0.0
        %1236 = vmatprep.subr.mxu0 0.0
        %1237 = vmatpush1.msra.mxu0 0.0
        %1238 = vmatprep.subr.mxu0 0.0
        %1239 = vmatpush1.msra.mxu0 0.0
        %1240 = vmatprep.subr.mxu0 0.0
        %1241 = vmatpush1.msra.mxu0 0.0
        %1242 = vmatprep.subr.mxu0 0.0
        %1243 = vmatpush1.msra.mxu0 0.0
        %1244 = vmatprep.mubr.f32.mxu0 0.0
        %1245 = vmatmul.mubr.f32.gmra.mrb[0].mxu0 %v1175
        %v1246 = vpop.f32.mrb[0].mxu0
        %v1247 = vadd.f32 0.0, %v1246
        %v1248 = vpop.f32.mrb[0].mxu0
        %1249 = vmatprep.mubr.f32.mxu0 0.0
        %1250 = vmatmul.mubr.f32.gmra.mrb[0].mxu0 %v1178
        %v1251 = vpop.f32.mrb[0].mxu0
        %v1252 = vadd.f32 0.0, %v1251
        %v1253 = vpop.f32.mrb[0].mxu0
        %1254 = vdwg.mxu0
        %v1255 = vadd.f32 %v976, %v1247
        %v1256 = vadd.f32 %v977, %v1252
        %1257 = vrot.lane.b32.xlu0 %v967, 96
        %v1258 = vpop.permute.xlu0 %1257
        %1259 = vrot.lane.b32.xlu0 %v968, 96
        %v1260 = vpop.permute.xlu0 %1259
        %1261 = vrot.lane.b32.xlu0 %v861, 96
        %v1262 = vpop.permute.xlu0 %1261
        %1263 = vrot.lane.b32.xlu0 %v866, 96
        %v1264 = vpop.permute.xlu0 %1263
        %v1265 = vsel %vm978, %v1258, 0
        %v1267 = vsel %vm978, %v1260, 0
        %v1269 = vsel %vm978, %v1262, 0
        %v1271 = vsel %vm978, %v1264, 0
        %1273 = vmatprep.subr.mxu0 0.0
        %1274 = vmatpush1.xpose.msra.mxu0 %v1269
        %1275 = vmatprep.subr.mxu0 0.0
        %1276 = vmatpush1.xpose.msra.mxu0 %v1271
        %1277 = vmatprep.subr.mxu0 0.0
        %1278 = vmatpush1.xpose.msra.mxu0 0.0
        %1279 = vmatprep.subr.mxu0 0.0
        %1280 = vmatpush1.xpose.msra.mxu0 0.0
        %1281 = vmatprep.subr.mxu0 0.0
        %1282 = vmatpush1.xpose.msra.mxu0 0.0
        %1283 = vmatprep.subr.mxu0 0.0
        %1284 = vmatpush1.xpose.msra.mxu0 0.0
        %1285 = vmatprep.subr.mxu0 0.0
        %1286 = vmatpush1.xpose.msra.mxu0 0.0
        %1287 = vmatprep.subr.mxu0 0.0
        %1288 = vmatpush1.xpose.msra.mxu0 0.0
        %1289 = vmatprep.subr.mxu0 0.0
        %1290 = vmatpush1.xpose.msra.mxu0 0.0
        %1291 = vmatprep.subr.mxu0 0.0
        %1292 = vmatpush1.xpose.msra.mxu0 0.0
        %1293 = vmatprep.subr.mxu0 0.0
        %1294 = vmatpush1.xpose.msra.mxu0 0.0
        %1295 = vmatprep.subr.mxu0 0.0
        %1296 = vmatpush1.xpose.msra.mxu0 0.0
        %1297 = vmatprep.subr.mxu0 0.0
        %1298 = vmatpush1.xpose.msra.mxu0 0.0
        %1299 = vmatprep.subr.mxu0 0.0
        %1300 = vmatpush1.xpose.msra.mxu0 0.0
        %1301 = vmatprep.subr.mxu0 0.0
        %1302 = vmatpush1.xpose.msra.mxu0 0.0
        %1303 = vmatprep.subr.mxu0 0.0
        %1304 = vmatpush1.xpose.msra.mxu0 0.0
        %1305 = vmatprep.subr.mxu0 0.0
        %1306 = vmatpush1.xpose.msra.mxu0 0.0
        %1307 = vmatprep.subr.mxu0 0.0
        %1308 = vmatpush1.xpose.msra.mxu0 0.0
        %1309 = vmatprep.subr.mxu0 0.0
        %1310 = vmatpush1.xpose.msra.mxu0 0.0
        %1311 = vmatprep.subr.mxu0 0.0
        %1312 = vmatpush1.xpose.msra.mxu0 0.0
        %1313 = vmatprep.subr.mxu0 0.0
        %1314 = vmatpush1.xpose.msra.mxu0 0.0
        %1315 = vmatprep.subr.mxu0 0.0
        %1316 = vmatpush1.xpose.msra.mxu0 0.0
        %1317 = vmatprep.subr.mxu0 0.0
        %1318 = vmatpush1.xpose.msra.mxu0 0.0
        %1319 = vmatprep.subr.mxu0 0.0
        %1320 = vmatpush1.xpose.msra.mxu0 0.0
        %1321 = vmatprep.subr.mxu0 0.0
        %1322 = vmatpush1.xpose.msra.mxu0 0.0
        %1323 = vmatprep.subr.mxu0 0.0
        %1324 = vmatpush1.xpose.msra.mxu0 0.0
        %1325 = vmatprep.subr.mxu0 0.0
        %1326 = vmatpush1.xpose.msra.mxu0 0.0
        %1327 = vmatprep.subr.mxu0 0.0
        %1328 = vmatpush1.xpose.msra.mxu0 0.0
        %1329 = vmatprep.subr.mxu0 0.0
        %1330 = vmatpush1.xpose.msra.mxu0 0.0
        %1331 = vmatprep.subr.mxu0 0.0
        %1332 = vmatpush1.xpose.msra.mxu0 0.0
        %1333 = vmatprep.subr.mxu0 0.0
        %1334 = vmatpush1.xpose.msra.mxu0 0.0
        %1335 = vmatprep.subr.mxu0 0.0
        %1336 = vmatpush1.xpose.msra.mxu0 0.0
        %1337 = vmatprep.mubr.f32.mxu0 0.0
        %1338 = vmatmul.mubr.f32.gmra.mrb[0].mxu0 %v1265
        %v1339 = vpop.f32.mrb[0].mxu0
        %v1340 = vadd.f32 %v671, %v1339
        %v1341 = vpop.f32.mrb[0].mxu0
        %1342 = vmatprep.mubr.f32.mxu0 0.0
        %1343 = vmatmul.mubr.f32.gmra.mrb[0].mxu0 %v1267
        %v1344 = vpop.f32.mrb[0].mxu0
        %v1345 = vadd.f32 %v672, %v1344
        %v1346 = vpop.f32.mrb[0].mxu0
        %1347 = vdwg.mxu0
        %v1348 = vsel %vm1066, %v1340, -inf
        %1349 = vmax.xlane.f32.xlu0 %v1348
        %v1350 = vpop.xlane.xlu0 %1349
        %v1351 = vsel %vm1066, %v1345, -inf
        %1352 = vmax.xlane.f32.xlu0 %v1351
        %v1353 = vpop.xlane.xlu0 %1352
        %v1354 = vsub.f32 %v1340, %v1350
        %v1355 = vsub.f32 %v1345, %v1353
        %v1356 = vmul.f32 %v1354, 1.442695
        %v1357 = vpow.pop %v1356
        %v1358 = vmul.f32 %v1355, 1.442695
        %v1359 = vpow.pop %v1358
        %v1360 = vsel %vm1066, %v1357, 0.0
        %1361 = vadd.xlane.f32.xlu0 %v1360
        %v1362 = vpop.xlane.xlu0 %1361
        %v1363 = vsel %vm1066, %v1359, 0.0
        %1364 = vadd.xlane.f32.xlu0 %v1363
        %v1365 = vpop.xlane.xlu0 %1364
        %v1366 = vrcp.pop %v1362
        %v1367 = vrcp.pop %v1365
        %v1368 = vmul.f32 %v1357, %v1366
        %v1369 = vmul.f32 %v1359, %v1367
        %1372 = vrot.lane.b32.xlu0 %v959, 96
        %v1373 = vpop.permute.xlu0 %1372
        %1374 = vrot.lane.b32.xlu0 %v964, 96
        %v1375 = vpop.permute.xlu0 %1374
        %v1379 = vsel %vm1066, %v1368, 0
        %v1382 = vsel %vm1066, %v1369, 0
        %1384 = vmatprep.subr.mxu0 0.0
        %1385 = vmatpush1.msra.mxu0 %v1373
        %1386 = vmatprep.subr.mxu0 0.0
        %1387 = vmatpush1.msra.mxu0 %v1375
        %1388 = vmatprep.subr.mxu0 0.0
        %1389 = vmatpush1.msra.mxu0 0.0
        %1390 = vmatprep.subr.mxu0 0.0
        %1391 = vmatpush1.msra.mxu0 0.0
        %1392 = vmatprep.subr.mxu0 0.0
        %1393 = vmatpush1.msra.mxu0 0.0
        %1394 = vmatprep.subr.mxu0 0.0
        %1395 = vmatpush1.msra.mxu0 0.0
        %1396 = vmatprep.subr.mxu0 0.0
        %1397 = vmatpush1.msra.mxu0 0.0
        %1398 = vmatprep.subr.mxu0 0.0
        %1399 = vmatpush1.msra.mxu0 0.0
        %1400 = vmatprep.subr.mxu0 0.0
        %1401 = vmatpush1.msra.mxu0 0.0
        %1402 = vmatprep.subr.mxu0 0.0
        %1403 = vmatpush1.msra.mxu0 0.0
        %1404 = vmatprep.subr.mxu0 0.0
        %1405 = vmatpush1.msra.mxu0 0.0
        %1406 = vmatprep.subr.mxu0 0.0
        %1407 = vmatpush1.msra.mxu0 0.0
        %1408 = vmatprep.subr.mxu0 0.0
        %1409 = vmatpush1.msra.mxu0 0.0
        %1410 = vmatprep.subr.mxu0 0.0
        %1411 = vmatpush1.msra.mxu0 0.0
        %1412 = vmatprep.subr.mxu0 0.0
        %1413 = vmatpush1.msra.mxu0 0.0
        %1414 = vmatprep.subr.mxu0 0.0
        %1415 = vmatpush1.msra.mxu0 0.0
        %1416 = vmatprep.subr.mxu0 0.0
        %1417 = vmatpush1.msra.mxu0 0.0
        %1418 = vmatprep.subr.mxu0 0.0
        %1419 = vmatpush1.msra.mxu0 0.0
        %1420 = vmatprep.subr.mxu0 0.0
        %1421 = vmatpush1.msra.mxu0 0.0
        %1422 = vmatprep.subr.mxu0 0.0
        %1423 = vmatpush1.msra.mxu0 0.0
        %1424 = vmatprep.subr.mxu0 0.0
        %1425 = vmatpush1.msra.mxu0 0.0
        %1426 = vmatprep.subr.mxu0 0.0
        %1427 = vmatpush1.msra.mxu0 0.0
        %1428 = vmatprep.subr.mxu0 0.0
        %1429 = vmatpush1.msra.mxu0 0.0
        %1430 = vmatprep.subr.mxu0 0.0
        %1431 = vmatpush1.msra.mxu0 0.0
        %1432 = vmatprep.subr.mxu0 0.0
        %1433 = vmatpush1.msra.mxu0 0.0
        %1434 = vmatprep.subr.mxu0 0.0
        %1435 = vmatpush1.msra.mxu0 0.0
        %1436 = vmatprep.subr.mxu0 0.0
        %1437 = vmatpush1.msra.mxu0 0.0
        %1438 = vmatprep.subr.mxu0 0.0
        %1439 = vmatpush1.msra.mxu0 0.0
        %1440 = vmatprep.subr.mxu0 0.0
        %1441 = vmatpush1.msra.mxu0 0.0
        %1442 = vmatprep.subr.mxu0 0.0
        %1443 = vmatpush1.msra.mxu0 0.0
        %1444 = vmatprep.subr.mxu0 0.0
        %1445 = vmatpush1.msra.mxu0 0.0
        %1446 = vmatprep.subr.mxu0 0.0
        %1447 = vmatpush1.msra.mxu0 0.0
        %1448 = vmatprep.mubr.f32.mxu0 0.0
        %1449 = vmatmul.mubr.f32.gmra.mrb[0].mxu0 %v1379
        %v1450 = vpop.f32.mrb[0].mxu0
        %v1451 = vadd.f32 0.0, %v1450
        %v1452 = vpop.f32.mrb[0].mxu0
        %1453 = vmatprep.mubr.f32.mxu0 0.0
        %1454 = vmatmul.mubr.f32.gmra.mrb[0].mxu0 %v1382
        %v1455 = vpop.f32.mrb[0].mxu0
        %v1456 = vadd.f32 0.0, %v1455
        %v1457 = vpop.f32.mrb[0].mxu0
        %1458 = vdwg.mxu0
        %v1459 = vld [vmem:[#allocation14 + $0x20] sm:$0xff]
        %v1460 = vld [vmem:[#allocation14 + $0x28] sm:$0xff]
        %v1461 = vld [vmem:[#allocation14 + $0x30] sm:$0xff]
        %v1462 = vld [vmem:[#allocation14 + $0x38] sm:$0xff]
        %v1464 = vsel %vm978, %v1451, 0
        %v1467 = vsel %vm978, %v1456, 0
        %1469 = vmatprep.subr.mxu0 0.0
        %1470 = vmatpush1.msra.mxu0 %v1459
        %1471 = vmatprep.subr.mxu0 0.0
        %1472 = vmatpush1.msra.mxu0 %v1460
        %1473 = vmatprep.subr.mxu0 0.0
        %1474 = vmatpush1.msra.mxu0 %v1461
        %1475 = vmatprep.subr.mxu0 0.0
        %1476 = vmatpush1.msra.mxu0 %v1462
        %1477 = vmatprep.subr.mxu0 0.0
        %1478 = vmatpush1.msra.mxu0 0.0
        %1479 = vmatprep.subr.mxu0 0.0
        %1480 = vmatpush1.msra.mxu0 0.0
        %1481 = vmatprep.subr.mxu0 0.0
        %1482 = vmatpush1.msra.mxu0 0.0
        %1483 = vmatprep.subr.mxu0 0.0
        %1484 = vmatpush1.msra.mxu0 0.0
        %1485 = vmatprep.subr.mxu0 0.0
        %1486 = vmatpush1.msra.mxu0 0.0
        %1487 = vmatprep.subr.mxu0 0.0
        %1488 = vmatpush1.msra.mxu0 0.0
        %1489 = vmatprep.subr.mxu0 0.0
        %1490 = vmatpush1.msra.mxu0 0.0
        %1491 = vmatprep.subr.mxu0 0.0
        %1492 = vmatpush1.msra.mxu0 0.0
        %1493 = vmatprep.subr.mxu0 0.0
        %1494 = vmatpush1.msra.mxu0 0.0
        %1495 = vmatprep.subr.mxu0 0.0
        %1496 = vmatpush1.msra.mxu0 0.0
        %1497 = vmatprep.subr.mxu0 0.0
        %1498 = vmatpush1.msra.mxu0 0.0
        %1499 = vmatprep.subr.mxu0 0.0
        %1500 = vmatpush1.msra.mxu0 0.0
        %1501 = vmatprep.subr.mxu0 0.0
        %1502 = vmatpush1.msra.mxu0 0.0
        %1503 = vmatprep.subr.mxu0 0.0
        %1504 = vmatpush1.msra.mxu0 0.0
        %1505 = vmatprep.subr.mxu0 0.0
        %1506 = vmatpush1.msra.mxu0 0.0
        %1507 = vmatprep.subr.mxu0 0.0
        %1508 = vmatpush1.msra.mxu0 0.0
        %1509 = vmatprep.subr.mxu0 0.0
        %1510 = vmatpush1.msra.mxu0 0.0
        %1511 = vmatprep.subr.mxu0 0.0
        %1512 = vmatpush1.msra.mxu0 0.0
        %1513 = vmatprep.subr.mxu0 0.0
        %1514 = vmatpush1.msra.mxu0 0.0
        %1515 = vmatprep.subr.mxu0 0.0
        %1516 = vmatpush1.msra.mxu0 0.0
        %1517 = vmatprep.subr.mxu0 0.0
        %1518 = vmatpush1.msra.mxu0 0.0
        %1519 = vmatprep.subr.mxu0 0.0
        %1520 = vmatpush1.msra.mxu0 0.0
        %1521 = vmatprep.subr.mxu0 0.0
        %1522 = vmatpush1.msra.mxu0 0.0
        %1523 = vmatprep.subr.mxu0 0.0
        %1524 = vmatpush1.msra.mxu0 0.0
        %1525 = vmatprep.subr.mxu0 0.0
        %1526 = vmatpush1.msra.mxu0 0.0
        %1527 = vmatprep.subr.mxu0 0.0
        %1528 = vmatpush1.msra.mxu0 0.0
        %1529 = vmatprep.subr.mxu0 0.0
        %1530 = vmatpush1.msra.mxu0 0.0
        %1531 = vmatprep.subr.mxu0 0.0
        %1532 = vmatpush1.msra.mxu0 0.0
        %1533 = vmatprep.mubr.f32.mxu0 0.0
        %1534 = vmatmul.mubr.f32.gmra.mrb[0].mxu0 %v1464
        %v1535 = vpop.f32.mrb[0].mxu0
        %v1536 = vadd.f32 0.0, %v1535
        %v1537 = vpop.f32.mrb[0].mxu0
        %1538 = vmatprep.mubr.f32.mxu0 0.0
        %1539 = vmatmul.mubr.f32.gmra.mrb[0].mxu0 %v1467
        %v1540 = vpop.f32.mrb[0].mxu0
        %v1541 = vadd.f32 0.0, %v1540
        %v1542 = vpop.f32.mrb[0].mxu0
        %1543 = vdwg.mxu0
        %v1544 = vadd.f32 %v1255, %v1536
        %v1545 = vadd.f32 %v1256, %v1541
        %1546 = vrot.lane.b32.xlu0 %v967, 64
        %v1547 = vpop.permute.xlu0 %1546
        %1548 = vrot.lane.b32.xlu0 %v968, 64
        %v1549 = vpop.permute.xlu0 %1548
        %1550 = vrot.lane.b32.xlu0 %v861, 64
        %v1551 = vpop.permute.xlu0 %1550
        %1552 = vrot.lane.b32.xlu0 %v866, 64
        %v1553 = vpop.permute.xlu0 %1552
        %v1554 = vsel %vm978, %v1547, 0
        %v1556 = vsel %vm978, %v1549, 0
        %v1558 = vsel %vm978, %v1551, 0
        %v1560 = vsel %vm978, %v1553, 0
        %1562 = vmatprep.subr.mxu0 0.0
        %1563 = vmatpush1.xpose.msra.mxu0 %v1558
        %1564 = vmatprep.subr.mxu0 0.0
        %1565 = vmatpush1.xpose.msra.mxu0 %v1560
        %1566 = vmatprep.subr.mxu0 0.0
        %1567 = vmatpush1.xpose.msra.mxu0 0.0
        %1568 = vmatprep.subr.mxu0 0.0
        %1569 = vmatpush1.xpose.msra.mxu0 0.0
        %1570 = vmatprep.subr.mxu0 0.0
        %1571 = vmatpush1.xpose.msra.mxu0 0.0
        %1572 = vmatprep.subr.mxu0 0.0
        %1573 = vmatpush1.xpose.msra.mxu0 0.0
        %1574 = vmatprep.subr.mxu0 0.0
        %1575 = vmatpush1.xpose.msra.mxu0 0.0
        %1576 = vmatprep.subr.mxu0 0.0
        %1577 = vmatpush1.xpose.msra.mxu0 0.0
        %1578 = vmatprep.subr.mxu0 0.0
        %1579 = vmatpush1.xpose.msra.mxu0 0.0
        %1580 = vmatprep.subr.mxu0 0.0
        %1581 = vmatpush1.xpose.msra.mxu0 0.0
        %1582 = vmatprep.subr.mxu0 0.0
        %1583 = vmatpush1.xpose.msra.mxu0 0.0
        %1584 = vmatprep.subr.mxu0 0.0
        %1585 = vmatpush1.xpose.msra.mxu0 0.0
        %1586 = vmatprep.subr.mxu0 0.0
        %1587 = vmatpush1.xpose.msra.mxu0 0.0
        %1588 = vmatprep.subr.mxu0 0.0
        %1589 = vmatpush1.xpose.msra.mxu0 0.0
        %1590 = vmatprep.subr.mxu0 0.0
        %1591 = vmatpush1.xpose.msra.mxu0 0.0
        %1592 = vmatprep.subr.mxu0 0.0
        %1593 = vmatpush1.xpose.msra.mxu0 0.0
        %1594 = vmatprep.subr.mxu0 0.0
        %1595 = vmatpush1.xpose.msra.mxu0 0.0
        %1596 = vmatprep.subr.mxu0 0.0
        %1597 = vmatpush1.xpose.msra.mxu0 0.0
        %1598 = vmatprep.subr.mxu0 0.0
        %1599 = vmatpush1.xpose.msra.mxu0 0.0
        %1600 = vmatprep.subr.mxu0 0.0
        %1601 = vmatpush1.xpose.msra.mxu0 0.0
        %1602 = vmatprep.subr.mxu0 0.0
        %1603 = vmatpush1.xpose.msra.mxu0 0.0
        %1604 = vmatprep.subr.mxu0 0.0
        %1605 = vmatpush1.xpose.msra.mxu0 0.0
        %1606 = vmatprep.subr.mxu0 0.0
        %1607 = vmatpush1.xpose.msra.mxu0 0.0
        %1608 = vmatprep.subr.mxu0 0.0
        %1609 = vmatpush1.xpose.msra.mxu0 0.0
        %1610 = vmatprep.subr.mxu0 0.0
        %1611 = vmatpush1.xpose.msra.mxu0 0.0
        %1612 = vmatprep.subr.mxu0 0.0
        %1613 = vmatpush1.xpose.msra.mxu0 0.0
        %1614 = vmatprep.subr.mxu0 0.0
        %1615 = vmatpush1.xpose.msra.mxu0 0.0
        %1616 = vmatprep.subr.mxu0 0.0
        %1617 = vmatpush1.xpose.msra.mxu0 0.0
        %1618 = vmatprep.subr.mxu0 0.0
        %1619 = vmatpush1.xpose.msra.mxu0 0.0
        %1620 = vmatprep.subr.mxu0 0.0
        %1621 = vmatpush1.xpose.msra.mxu0 0.0
        %1622 = vmatprep.subr.mxu0 0.0
        %1623 = vmatpush1.xpose.msra.mxu0 0.0
        %1624 = vmatprep.subr.mxu0 0.0
        %1625 = vmatpush1.xpose.msra.mxu0 0.0
        %1626 = vmatprep.mubr.f32.mxu0 0.0
        %1627 = vmatmul.mubr.f32.gmra.mrb[0].mxu0 %v1554
        %v1628 = vpop.f32.mrb[0].mxu0
        %v1629 = vadd.f32 %v671, %v1628
        %v1630 = vpop.f32.mrb[0].mxu0
        %1631 = vmatprep.mubr.f32.mxu0 0.0
        %1632 = vmatmul.mubr.f32.gmra.mrb[0].mxu0 %v1556
        %v1633 = vpop.f32.mrb[0].mxu0
        %v1634 = vadd.f32 %v672, %v1633
        %v1635 = vpop.f32.mrb[0].mxu0
        %1636 = vdwg.mxu0
        %v1637 = vsel %vm1066, %v1629, -inf
        %1638 = vmax.xlane.f32.xlu0 %v1637
        %v1639 = vpop.xlane.xlu0 %1638
        %v1640 = vsel %vm1066, %v1634, -inf
        %1641 = vmax.xlane.f32.xlu0 %v1640
        %v1642 = vpop.xlane.xlu0 %1641
        %v1643 = vsub.f32 %v1629, %v1639
        %v1644 = vsub.f32 %v1634, %v1642
        %v1645 = vmul.f32 %v1643, 1.442695
        %v1646 = vpow.pop %v1645
        %v1647 = vmul.f32 %v1644, 1.442695
        %v1648 = vpow.pop %v1647
        %v1649 = vsel %vm1066, %v1646, 0.0
        %1650 = vadd.xlane.f32.xlu0 %v1649
        %v1651 = vpop.xlane.xlu0 %1650
        %v1652 = vsel %vm1066, %v1648, 0.0
        %1653 = vadd.xlane.f32.xlu0 %v1652
        %v1654 = vpop.xlane.xlu0 %1653
        %v1655 = vrcp.pop %v1651
        %v1656 = vrcp.pop %v1654
        %v1657 = vmul.f32 %v1646, %v1655
        %v1658 = vmul.f32 %v1648, %v1656
        %1659 = vrot.lane.b32.xlu0 %v959, 64
        %v1660 = vpop.permute.xlu0 %1659
        %1661 = vrot.lane.b32.xlu0 %v964, 64
        %v1662 = vpop.permute.xlu0 %1661
        %v1666 = vsel %vm1066, %v1657, 0
        %v1669 = vsel %vm1066, %v1658, 0
        %1671 = vmatprep.subr.mxu0 0.0
        %1672 = vmatpush1.msra.mxu0 %v1660
        %1673 = vmatprep.subr.mxu0 0.0
        %1674 = vmatpush1.msra.mxu0 %v1662
        %1675 = vmatprep.subr.mxu0 0.0
        %1676 = vmatpush1.msra.mxu0 0.0
        %1677 = vmatprep.subr.mxu0 0.0
        %1678 = vmatpush1.msra.mxu0 0.0
        %1679 = vmatprep.subr.mxu0 0.0
        %1680 = vmatpush1.msra.mxu0 0.0
        %1681 = vmatprep.subr.mxu0 0.0
        %1682 = vmatpush1.msra.mxu0 0.0
        %1683 = vmatprep.subr.mxu0 0.0
        %1684 = vmatpush1.msra.mxu0 0.0
        %1685 = vmatprep.subr.mxu0 0.0
        %1686 = vmatpush1.msra.mxu0 0.0
        %1687 = vmatprep.subr.mxu0 0.0
        %1688 = vmatpush1.msra.mxu0 0.0
        %1689 = vmatprep.subr.mxu0 0.0
        %1690 = vmatpush1.msra.mxu0 0.0
        %1691 = vmatprep.subr.mxu0 0.0
        %1692 = vmatpush1.msra.mxu0 0.0
        %1693 = vmatprep.subr.mxu0 0.0
        %1694 = vmatpush1.msra.mxu0 0.0
        %1695 = vmatprep.subr.mxu0 0.0
        %1696 = vmatpush1.msra.mxu0 0.0
        %1697 = vmatprep.subr.mxu0 0.0
        %1698 = vmatpush1.msra.mxu0 0.0
        %1699 = vmatprep.subr.mxu0 0.0
        %1700 = vmatpush1.msra.mxu0 0.0
        %1701 = vmatprep.subr.mxu0 0.0
        %1702 = vmatpush1.msra.mxu0 0.0
        %1703 = vmatprep.subr.mxu0 0.0
        %1704 = vmatpush1.msra.mxu0 0.0
        %1705 = vmatprep.subr.mxu0 0.0
        %1706 = vmatpush1.msra.mxu0 0.0
        %1707 = vmatprep.subr.mxu0 0.0
        %1708 = vmatpush1.msra.mxu0 0.0
        %1709 = vmatprep.subr.mxu0 0.0
        %1710 = vmatpush1.msra.mxu0 0.0
        %1711 = vmatprep.subr.mxu0 0.0
        %1712 = vmatpush1.msra.mxu0 0.0
        %1713 = vmatprep.subr.mxu0 0.0
        %1714 = vmatpush1.msra.mxu0 0.0
        %1715 = vmatprep.subr.mxu0 0.0
        %1716 = vmatpush1.msra.mxu0 0.0
        %1717 = vmatprep.subr.mxu0 0.0
        %1718 = vmatpush1.msra.mxu0 0.0
        %1719 = vmatprep.subr.mxu0 0.0
        %1720 = vmatpush1.msra.mxu0 0.0
        %1721 = vmatprep.subr.mxu0 0.0
        %1722 = vmatpush1.msra.mxu0 0.0
        %1723 = vmatprep.subr.mxu0 0.0
        %1724 = vmatpush1.msra.mxu0 0.0
        %1725 = vmatprep.subr.mxu0 0.0
        %1726 = vmatpush1.msra.mxu0 0.0
        %1727 = vmatprep.subr.mxu0 0.0
        %1728 = vmatpush1.msra.mxu0 0.0
        %1729 = vmatprep.subr.mxu0 0.0
        %1730 = vmatpush1.msra.mxu0 0.0
        %1731 = vmatprep.subr.mxu0 0.0
        %1732 = vmatpush1.msra.mxu0 0.0
        %1733 = vmatprep.subr.mxu0 0.0
        %1734 = vmatpush1.msra.mxu0 0.0
        %1735 = vmatprep.mubr.f32.mxu0 0.0
        %1736 = vmatmul.mubr.f32.gmra.mrb[0].mxu0 %v1666
        %v1737 = vpop.f32.mrb[0].mxu0
        %v1738 = vadd.f32 0.0, %v1737
        %v1739 = vpop.f32.mrb[0].mxu0
        %1740 = vmatprep.mubr.f32.mxu0 0.0
        %1741 = vmatmul.mubr.f32.gmra.mrb[0].mxu0 %v1669
        %v1742 = vpop.f32.mrb[0].mxu0
        %v1743 = vadd.f32 0.0, %v1742
        %v1744 = vpop.f32.mrb[0].mxu0
        %1745 = vdwg.mxu0
        %v1746 = vld [vmem:[#allocation14 + $0x40] sm:$0xff]
        %v1747 = vld [vmem:[#allocation14 + $0x48] sm:$0xff]
        %v1748 = vld [vmem:[#allocation14 + $0x50] sm:$0xff]
        %v1749 = vld [vmem:[#allocation14 + $0x58] sm:$0xff]
        %v1751 = vsel %vm978, %v1738, 0
        %v1754 = vsel %vm978, %v1743, 0
        %1756 = vmatprep.subr.mxu0 0.0
        %1757 = vmatpush1.msra.mxu0 %v1746
        %1758 = vmatprep.subr.mxu0 0.0
        %1759 = vmatpush1.msra.mxu0 %v1747
        %1760 = vmatprep.subr.mxu0 0.0
        %1761 = vmatpush1.msra.mxu0 %v1748
        %1762 = vmatprep.subr.mxu0 0.0
        %1763 = vmatpush1.msra.mxu0 %v1749
        %1764 = vmatprep.subr.mxu0 0.0
        %1765 = vmatpush1.msra.mxu0 0.0
        %1766 = vmatprep.subr.mxu0 0.0
        %1767 = vmatpush1.msra.mxu0 0.0
        %1768 = vmatprep.subr.mxu0 0.0
        %1769 = vmatpush1.msra.mxu0 0.0
        %1770 = vmatprep.subr.mxu0 0.0
        %1771 = vmatpush1.msra.mxu0 0.0
        %1772 = vmatprep.subr.mxu0 0.0
        %1773 = vmatpush1.msra.mxu0 0.0
        %1774 = vmatprep.subr.mxu0 0.0
        %1775 = vmatpush1.msra.mxu0 0.0
        %1776 = vmatprep.subr.mxu0 0.0
        %1777 = vmatpush1.msra.mxu0 0.0
        %1778 = vmatprep.subr.mxu0 0.0
        %1779 = vmatpush1.msra.mxu0 0.0
        %1780 = vmatprep.subr.mxu0 0.0
        %1781 = vmatpush1.msra.mxu0 0.0
        %1782 = vmatprep.subr.mxu0 0.0
        %1783 = vmatpush1.msra.mxu0 0.0
        %1784 = vmatprep.subr.mxu0 0.0
        %1785 = vmatpush1.msra.mxu0 0.0
        %1786 = vmatprep.subr.mxu0 0.0
        %1787 = vmatpush1.msra.mxu0 0.0
        %1788 = vmatprep.subr.mxu0 0.0
        %1789 = vmatpush1.msra.mxu0 0.0
        %1790 = vmatprep.subr.mxu0 0.0
        %1791 = vmatpush1.msra.mxu0 0.0
        %1792 = vmatprep.subr.mxu0 0.0
        %1793 = vmatpush1.msra.mxu0 0.0
        %1794 = vmatprep.subr.mxu0 0.0
        %1795 = vmatpush1.msra.mxu0 0.0
        %1796 = vmatprep.subr.mxu0 0.0
        %1797 = vmatpush1.msra.mxu0 0.0
        %1798 = vmatprep.subr.mxu0 0.0
        %1799 = vmatpush1.msra.mxu0 0.0
        %1800 = vmatprep.subr.mxu0 0.0
        %1801 = vmatpush1.msra.mxu0 0.0
        %1802 = vmatprep.subr.mxu0 0.0
        %1803 = vmatpush1.msra.mxu0 0.0
        %1804 = vmatprep.subr.mxu0 0.0
        %1805 = vmatpush1.msra.mxu0 0.0
        %1806 = vmatprep.subr.mxu0 0.0
        %1807 = vmatpush1.msra.mxu0 0.0
        %1808 = vmatprep.subr.mxu0 0.0
        %1809 = vmatpush1.msra.mxu0 0.0
        %1810 = vmatprep.subr.mxu0 0.0
        %1811 = vmatpush1.msra.mxu0 0.0
        %1812 = vmatprep.subr.mxu0 0.0
        %1813 = vmatpush1.msra.mxu0 0.0
        %1814 = vmatprep.subr.mxu0 0.0
        %1815 = vmatpush1.msra.mxu0 0.0
        %1816 = vmatprep.subr.mxu0 0.0
        %1817 = vmatpush1.msra.mxu0 0.0
        %1818 = vmatprep.subr.mxu0 0.0
        %1819 = vmatpush1.msra.mxu0 0.0
        %1820 = vmatprep.mubr.f32.mxu0 0.0
        %1821 = vmatmul.mubr.f32.gmra.mrb[0].mxu0 %v1751
        %v1822 = vpop.f32.mrb[0].mxu0
        %v1823 = vadd.f32 0.0, %v1822
        %v1824 = vpop.f32.mrb[0].mxu0
        %1825 = vmatprep.mubr.f32.mxu0 0.0
        %1826 = vmatmul.mubr.f32.gmra.mrb[0].mxu0 %v1754
        %v1827 = vpop.f32.mrb[0].mxu0
        %v1828 = vadd.f32 0.0, %v1827
        %v1829 = vpop.f32.mrb[0].mxu0
        %1830 = vdwg.mxu0
        %v1831 = vadd.f32 %v1544, %v1823
        %v1832 = vadd.f32 %v1545, %v1828
        %1833 = vrot.lane.b32.xlu0 %v967, 32
        %v1834 = vpop.permute.xlu0 %1833
        %1835 = vrot.lane.b32.xlu0 %v968, 32
        %v1836 = vpop.permute.xlu0 %1835
        %1837 = vrot.lane.b32.xlu0 %v861, 32
        %v1838 = vpop.permute.xlu0 %1837
        %1839 = vrot.lane.b32.xlu0 %v866, 32
        %v1840 = vpop.permute.xlu0 %1839
        %v1841 = vsel %vm978, %v1834, 0
        %v1843 = vsel %vm978, %v1836, 0
        %v1845 = vsel %vm978, %v1838, 0
        %v1847 = vsel %vm978, %v1840, 0
        %1849 = vmatprep.subr.mxu0 0.0
        %1850 = vmatpush1.xpose.msra.mxu0 %v1845
        %1851 = vmatprep.subr.mxu0 0.0
        %1852 = vmatpush1.xpose.msra.mxu0 %v1847
        %1853 = vmatprep.subr.mxu0 0.0
        %1854 = vmatpush1.xpose.msra.mxu0 0.0
        %1855 = vmatprep.subr.mxu0 0.0
        %1856 = vmatpush1.xpose.msra.mxu0 0.0
        %1857 = vmatprep.subr.mxu0 0.0
        %1858 = vmatpush1.xpose.msra.mxu0 0.0
        %1859 = vmatprep.subr.mxu0 0.0
        %1860 = vmatpush1.xpose.msra.mxu0 0.0
        %1861 = vmatprep.subr.mxu0 0.0
        %1862 = vmatpush1.xpose.msra.mxu0 0.0
        %1863 = vmatprep.subr.mxu0 0.0
        %1864 = vmatpush1.xpose.msra.mxu0 0.0
        %1865 = vmatprep.subr.mxu0 0.0
        %1866 = vmatpush1.xpose.msra.mxu0 0.0
        %1867 = vmatprep.subr.mxu0 0.0
        %1868 = vmatpush1.xpose.msra.mxu0 0.0
        %1869 = vmatprep.subr.mxu0 0.0
        %1870 = vmatpush1.xpose.msra.mxu0 0.0
        %1871 = vmatprep.subr.mxu0 0.0
        %1872 = vmatpush1.xpose.msra.mxu0 0.0
        %1873 = vmatprep.subr.mxu0 0.0
        %1874 = vmatpush1.xpose.msra.mxu0 0.0
        %1875 = vmatprep.subr.mxu0 0.0
        %1876 = vmatpush1.xpose.msra.mxu0 0.0
        %1877 = vmatprep.subr.mxu0 0.0
        %1878 = vmatpush1.xpose.msra.mxu0 0.0
        %1879 = vmatprep.subr.mxu0 0.0
        %1880 = vmatpush1.xpose.msra.mxu0 0.0
        %1881 = vmatprep.subr.mxu0 0.0
        %1882 = vmatpush1.xpose.msra.mxu0 0.0
        %1883 = vmatprep.subr.mxu0 0.0
        %1884 = vmatpush1.xpose.msra.mxu0 0.0
        %1885 = vmatprep.subr.mxu0 0.0
        %1886 = vmatpush1.xpose.msra.mxu0 0.0
        %1887 = vmatprep.subr.mxu0 0.0
        %1888 = vmatpush1.xpose.msra.mxu0 0.0
        %1889 = vmatprep.subr.mxu0 0.0
        %1890 = vmatpush1.xpose.msra.mxu0 0.0
        %1891 = vmatprep.subr.mxu0 0.0
        %1892 = vmatpush1.xpose.msra.mxu0 0.0
        %1893 = vmatprep.subr.mxu0 0.0
        %1894 = vmatpush1.xpose.msra.mxu0 0.0
        %1895 = vmatprep.subr.mxu0 0.0
        %1896 = vmatpush1.xpose.msra.mxu0 0.0
        %1897 = vmatprep.subr.mxu0 0.0
        %1898 = vmatpush1.xpose.msra.mxu0 0.0
        %1899 = vmatprep.subr.mxu0 0.0
        %1900 = vmatpush1.xpose.msra.mxu0 0.0
        %1901 = vmatprep.subr.mxu0 0.0
        %1902 = vmatpush1.xpose.msra.mxu0 0.0
        %1903 = vmatprep.subr.mxu0 0.0
        %1904 = vmatpush1.xpose.msra.mxu0 0.0
        %1905 = vmatprep.subr.mxu0 0.0
        %1906 = vmatpush1.xpose.msra.mxu0 0.0
        %1907 = vmatprep.subr.mxu0 0.0
        %1908 = vmatpush1.xpose.msra.mxu0 0.0
        %1909 = vmatprep.subr.mxu0 0.0
        %1910 = vmatpush1.xpose.msra.mxu0 0.0
        %1911 = vmatprep.subr.mxu0 0.0
        %1912 = vmatpush1.xpose.msra.mxu0 0.0
        %1913 = vmatprep.mubr.f32.mxu0 0.0
        %1914 = vmatmul.mubr.f32.gmra.mrb[0].mxu0 %v1841
        %v1915 = vpop.f32.mrb[0].mxu0
        %v1916 = vadd.f32 %v671, %v1915
        %v1917 = vpop.f32.mrb[0].mxu0
        %1918 = vmatprep.mubr.f32.mxu0 0.0
        %1919 = vmatmul.mubr.f32.gmra.mrb[0].mxu0 %v1843
        %v1920 = vpop.f32.mrb[0].mxu0
        %v1921 = vadd.f32 %v672, %v1920
        %v1922 = vpop.f32.mrb[0].mxu0
        %1923 = vdwg.mxu0
        %v1924 = vsel %vm1066, %v1916, -inf
        %1925 = vmax.xlane.f32.xlu0 %v1924
        %v1926 = vpop.xlane.xlu0 %1925
        %v1927 = vsel %vm1066, %v1921, -inf
        %1928 = vmax.xlane.f32.xlu0 %v1927
        %v1929 = vpop.xlane.xlu0 %1928
        %v1930 = vsub.f32 %v1916, %v1926
        %v1931 = vsub.f32 %v1921, %v1929
        %v1932 = vmul.f32 %v1930, 1.442695
        %v1933 = vpow.pop %v1932
        %v1934 = vmul.f32 %v1931, 1.442695
        %v1935 = vpow.pop %v1934
        %v1936 = vsel %vm1066, %v1933, 0.0
        %1937 = vadd.xlane.f32.xlu0 %v1936
        %v1938 = vpop.xlane.xlu0 %1937
        %v1939 = vsel %vm1066, %v1935, 0.0
        %1940 = vadd.xlane.f32.xlu0 %v1939
        %v1941 = vpop.xlane.xlu0 %1940
        %v1942 = vrcp.pop %v1938
        %v1943 = vrcp.pop %v1941
        %v1944 = vmul.f32 %v1933, %v1942
        %v1945 = vmul.f32 %v1935, %v1943
        %1946 = vrot.lane.b32.xlu0 %v959, 32
        %v1947 = vpop.permute.xlu0 %1946
        %1948 = vrot.lane.b32.xlu0 %v964, 32
        %v1949 = vpop.permute.xlu0 %1948
        %v1953 = vsel %vm1066, %v1944, 0
        %v1956 = vsel %vm1066, %v1945, 0
        %1958 = vmatprep.subr.mxu0 0.0
        %1959 = vmatpush1.msra.mxu0 %v1947
        %1960 = vmatprep.subr.mxu0 0.0
        %1961 = vmatpush1.msra.mxu0 %v1949
        %1962 = vmatprep.subr.mxu0 0.0
        %1963 = vmatpush1.msra.mxu0 0.0
        %1964 = vmatprep.subr.mxu0 0.0
        %1965 = vmatpush1.msra.mxu0 0.0
        %1966 = vmatprep.subr.mxu0 0.0
        %1967 = vmatpush1.msra.mxu0 0.0
        %1968 = vmatprep.subr.mxu0 0.0
        %1969 = vmatpush1.msra.mxu0 0.0
        %1970 = vmatprep.subr.mxu0 0.0
        %1971 = vmatpush1.msra.mxu0 0.0
        %1972 = vmatprep.subr.mxu0 0.0
        %1973 = vmatpush1.msra.mxu0 0.0
        %1974 = vmatprep.subr.mxu0 0.0
        %1975 = vmatpush1.msra.mxu0 0.0
        %1976 = vmatprep.subr.mxu0 0.0
        %1977 = vmatpush1.msra.mxu0 0.0
        %1978 = vmatprep.subr.mxu0 0.0
        %1979 = vmatpush1.msra.mxu0 0.0
        %1980 = vmatprep.subr.mxu0 0.0
        %1981 = vmatpush1.msra.mxu0 0.0
        %1982 = vmatprep.subr.mxu0 0.0
        %1983 = vmatpush1.msra.mxu0 0.0
        %1984 = vmatprep.subr.mxu0 0.0
        %1985 = vmatpush1.msra.mxu0 0.0
        %1986 = vmatprep.subr.mxu0 0.0
        %1987 = vmatpush1.msra.mxu0 0.0
        %1988 = vmatprep.subr.mxu0 0.0
        %1989 = vmatpush1.msra.mxu0 0.0
        %1990 = vmatprep.subr.mxu0 0.0
        %1991 = vmatpush1.msra.mxu0 0.0
        %1992 = vmatprep.subr.mxu0 0.0
        %1993 = vmatpush1.msra.mxu0 0.0
        %1994 = vmatprep.subr.mxu0 0.0
        %1995 = vmatpush1.msra.mxu0 0.0
        %1996 = vmatprep.subr.mxu0 0.0
        %1997 = vmatpush1.msra.mxu0 0.0
        %1998 = vmatprep.subr.mxu0 0.0
        %1999 = vmatpush1.msra.mxu0 0.0
        %2000 = vmatprep.subr.mxu0 0.0
        %2001 = vmatpush1.msra.mxu0 0.0
        %2002 = vmatprep.subr.mxu0 0.0
        %2003 = vmatpush1.msra.mxu0 0.0
        %2004 = vmatprep.subr.mxu0 0.0
        %2005 = vmatpush1.msra.mxu0 0.0
        %2006 = vmatprep.subr.mxu0 0.0
        %2007 = vmatpush1.msra.mxu0 0.0
        %2008 = vmatprep.subr.mxu0 0.0
        %2009 = vmatpush1.msra.mxu0 0.0
        %2010 = vmatprep.subr.mxu0 0.0
        %2011 = vmatpush1.msra.mxu0 0.0
        %2012 = vmatprep.subr.mxu0 0.0
        %2013 = vmatpush1.msra.mxu0 0.0
        %2014 = vmatprep.subr.mxu0 0.0
        %2015 = vmatpush1.msra.mxu0 0.0
        %2016 = vmatprep.subr.mxu0 0.0
        %2017 = vmatpush1.msra.mxu0 0.0
        %2018 = vmatprep.subr.mxu0 0.0
        %2019 = vmatpush1.msra.mxu0 0.0
        %2020 = vmatprep.subr.mxu0 0.0
        %2021 = vmatpush1.msra.mxu0 0.0
        %2022 = vmatprep.mubr.f32.mxu0 0.0
        %2023 = vmatmul.mubr.f32.gmra.mrb[0].mxu0 %v1953
        %v2024 = vpop.f32.mrb[0].mxu0
        %v2025 = vadd.f32 0.0, %v2024
        %v2026 = vpop.f32.mrb[0].mxu0
        %2027 = vmatprep.mubr.f32.mxu0 0.0
        %2028 = vmatmul.mubr.f32.gmra.mrb[0].mxu0 %v1956
        %v2029 = vpop.f32.mrb[0].mxu0
        %v2030 = vadd.f32 0.0, %v2029
        %v2031 = vpop.f32.mrb[0].mxu0
        %2032 = vdwg.mxu0
        %v2033 = vld [vmem:[#allocation14 + $0x60] sm:$0xff]
        %v2034 = vld [vmem:[#allocation14 + $0x68] sm:$0xff]
        %v2035 = vld [vmem:[#allocation14 + $0x70] sm:$0xff]
        %v2036 = vld [vmem:[#allocation14 + $0x78] sm:$0xff]
        %v2038 = vsel %vm978, %v2025, 0
        %v2041 = vsel %vm978, %v2030, 0
        %2043 = vmatprep.subr.mxu0 0.0
        %2044 = vmatpush1.msra.mxu0 %v2033
        %2045 = vmatprep.subr.mxu0 0.0
        %2046 = vmatpush1.msra.mxu0 %v2034
        %2047 = vmatprep.subr.mxu0 0.0
        %2048 = vmatpush1.msra.mxu0 %v2035
        %2049 = vmatprep.subr.mxu0 0.0
        %2050 = vmatpush1.msra.mxu0 %v2036
        %2051 = vmatprep.subr.mxu0 0.0
        %2052 = vmatpush1.msra.mxu0 0.0
        %2053 = vmatprep.subr.mxu0 0.0
        %2054 = vmatpush1.msra.mxu0 0.0
        %2055 = vmatprep.subr.mxu0 0.0
        %2056 = vmatpush1.msra.mxu0 0.0
        %2057 = vmatprep.subr.mxu0 0.0
        %2058 = vmatpush1.msra.mxu0 0.0
        %2059 = vmatprep.subr.mxu0 0.0
        %2060 = vmatpush1.msra.mxu0 0.0
        %2061 = vmatprep.subr.mxu0 0.0
        %2062 = vmatpush1.msra.mxu0 0.0
        %2063 = vmatprep.subr.mxu0 0.0
        %2064 = vmatpush1.msra.mxu0 0.0
        %2065 = vmatprep.subr.mxu0 0.0
        %2066 = vmatpush1.msra.mxu0 0.0
        %2067 = vmatprep.subr.mxu0 0.0
        %2068 = vmatpush1.msra.mxu0 0.0
        %2069 = vmatprep.subr.mxu0 0.0
        %2070 = vmatpush1.msra.mxu0 0.0
        %2071 = vmatprep.subr.mxu0 0.0
        %2072 = vmatpush1.msra.mxu0 0.0
        %2073 = vmatprep.subr.mxu0 0.0
        %2074 = vmatpush1.msra.mxu0 0.0
        %2075 = vmatprep.subr.mxu0 0.0
        %2076 = vmatpush1.msra.mxu0 0.0
        %2077 = vmatprep.subr.mxu0 0.0
        %2078 = vmatpush1.msra.mxu0 0.0
        %2079 = vmatprep.subr.mxu0 0.0
        %2080 = vmatpush1.msra.mxu0 0.0
        %2081 = vmatprep.subr.mxu0 0.0
        %2082 = vmatpush1.msra.mxu0 0.0
        %2083 = vmatprep.subr.mxu0 0.0
        %2084 = vmatpush1.msra.mxu0 0.0
        %2085 = vmatprep.subr.mxu0 0.0
        %2086 = vmatpush1.msra.mxu0 0.0
        %2087 = vmatprep.subr.mxu0 0.0
        %2088 = vmatpush1.msra.mxu0 0.0
        %2089 = vmatprep.subr.mxu0 0.0
        %2090 = vmatpush1.msra.mxu0 0.0
        %2091 = vmatprep.subr.mxu0 0.0
        %2092 = vmatpush1.msra.mxu0 0.0
        %2093 = vmatprep.subr.mxu0 0.0
        %2094 = vmatpush1.msra.mxu0 0.0
        %2095 = vmatprep.subr.mxu0 0.0
        %2096 = vmatpush1.msra.mxu0 0.0
        %2097 = vmatprep.subr.mxu0 0.0
        %2098 = vmatpush1.msra.mxu0 0.0
        %2099 = vmatprep.subr.mxu0 0.0
        %2100 = vmatpush1.msra.mxu0 0.0
        %2101 = vmatprep.subr.mxu0 0.0
        %2102 = vmatpush1.msra.mxu0 0.0
        %2103 = vmatprep.subr.mxu0 0.0
        %2104 = vmatpush1.msra.mxu0 0.0
        %2105 = vmatprep.subr.mxu0 0.0
        %2106 = vmatpush1.msra.mxu0 0.0
        %2107 = vmatprep.mubr.f32.mxu0 0.0
        %2108 = vmatmul.mubr.f32.gmra.mrb[0].mxu0 %v2038
        %v2109 = vpop.f32.mrb[0].mxu0
        %v2110 = vadd.f32 0.0, %v2109
        %v2111 = vpop.f32.mrb[0].mxu0
        %2112 = vmatprep.mubr.f32.mxu0 0.0
        %2113 = vmatmul.mubr.f32.gmra.mrb[0].mxu0 %v2041
        %v2114 = vpop.f32.mrb[0].mxu0
        %v2115 = vadd.f32 0.0, %v2114
        %v2116 = vpop.f32.mrb[0].mxu0
        %2117 = vdwg.mxu0
        %v2118 = vadd.f32 %v1831, %v2110
        %v2119 = vadd.f32 %v1832, %v2115
        %2120 = vadd.xlane.f32.xlu0 %v2118
        %v2121 = vpop.xlane.xlu0 %2120
        %2122 = vadd.xlane.f32.xlu0 %v2119
        %v2123 = vpop.xlane.xlu0 %2122
        %v2124 = vrcp.pop 128.0
        %v2125 = vmul.f32 %v2121, %v2124
        %v2126 = vmul.f32 %v2123, %v2124
        %v2127 = vsub.f32 %v2118, %v2125
        %v2128 = vsub.f32 %v2119, %v2126
        %v2129 = vmul.f32 %v2127, %v2127
        %v2130 = vmul.f32 %v2128, %v2128
        %2131 = vadd.xlane.f32.xlu0 %v2129
        %v2132 = vpop.xlane.xlu0 %2131
        %2133 = vadd.xlane.f32.xlu0 %v2130
        %v2134 = vpop.xlane.xlu0 %2133
        %v2135 = vmul.f32 %v2132, %v2124
        %v2136 = vmul.f32 %v2134, %v2124
        %v2137 = vadd.f32 %v2135, 1e-05
        %v2138 = vadd.f32 %v2136, 1e-05
        %v2139 = vrsqrt.pop %v2137
        %v2140 = vrsqrt.pop %v2138
        %v2141 = vmul.f32 %v2127, %v2139
        %v2142 = vmul.f32 %v2128, %v2140
        %v2143 = vld [vmem:[%s12] sm:$0x1]
        %v2145 = vlaneseq
        %v2146 = vshrl.u32 %v2145, 7
        %v2147 = vsub.s32 0, %v2146
        %v2148 = vrot.slane %v2143, %v2147
        %v2150 = vmul.f32 %v2141, %v2148
        %v2151 = vmul.f32 %v2142, %v2148
        %v2152 = vld [vmem:[%s13] sm:$0x1]
        %v2154 = vlaneseq
        %v2155 = vshrl.u32 %v2154, 7
        %v2156 = vsub.s32 0, %v2155
        %v2157 = vrot.slane %v2152, %v2156
        %v2159 = vadd.f32 %v2150, %v2157
        %v2160 = vadd.f32 %v2151, %v2157
        %2161 = vst [vmem:[%s660] sm:$0xff] %v2159
        %2162 = vst [vmem:[%s660 + $0x8] sm:$0xff] %v2160
        %s2163 = sand.u32 %s361, 1
        %s2164 = scalar_lea.sflag [#allocation4], %s2163
        %s2165 = sand.u32 %s361, 1
        %s2166 = smul.addr %s2165, 16
        %s2167 = scalar_lea.vmem [#allocation16], %s2166
        // Predicated region
        $region109: #{tpu_custom_call.1} parent=75 // pred_check
          %p2168 = pneg %p371
        $region110: #{tpu_custom_call.1} parent=75 // pred_check_branch
          %2170 = sbr.rel (%p2168) target = $region112
        $region111: #{tpu_custom_call.1} parent=75 // pred_region
          %s2172 = ssub.s32 256, 256
          %2173 = vsyncadd %s2164, %s2172
          %s2174 = smul.addr %s39, 2
          %s2175 = smul.addr %s2174, 128
          %s2176 = scalar_lea.hbm %s14, %s2175
          %s2177 = sshll.u32 %s2167, 4
          %s2178 = int_to_ptr.vmem [resolvable:$true] %s2177
          %2183 = dma.vmem_to_hbm [thread:$0]  %s2178, 256, %s2176, %s2164, 128, 128, 8
        $region112: #{tpu_custom_call.1} parent=75 // pred_fallthru
          _
      $region76: #{tpu_custom_call.1} parent=5 // pred_fallthru
        _
      %p2184 = scmp.le.s32.totalorder 2, %s34
      // Predicated region
      $region113: #{tpu_custom_call.1} parent=5 // pred_check
        %p2185 = pneg %p2184
      $region114: #{tpu_custom_call.1} parent=5 // pred_check_branch
        %2187 = sbr.rel (%p2185) target = $region116
      $region115: #{tpu_custom_call.1} parent=5 // pred_region
        %s2188 = ssub.s32 %s34, 2
        // Predicated region
        $region117: #{tpu_custom_call.1} parent=115 // pred_check
          %p2189 = pneg %p377
        $region118: #{tpu_custom_call.1} parent=115 // pred_check_branch
          %2191 = sbr.rel (%p2189) target = $region120
        $region119: #{tpu_custom_call.1} parent=115 // pred_region
          %s2192 = sand.u32 %s362, 1
          %s2193 = scalar_lea.sflag [#allocation4], %s2192
          %s2194 = sand.u32 %s362, 1
          %s2195 = smul.addr %s2194, 16
          %s2196 = scalar_lea.vmem [#allocation16], %s2195
          %2197 = dma.done %s2193, 256
        $region120: #{tpu_custom_call.1} parent=115 // pred_fallthru
          _
      $region116: #{tpu_custom_call.1} parent=5 // pred_fallthru
        _
    $region6: #{tpu_custom_call.1} parent=1 // loop_footer
      %s38 = sadd.s32 1, %s34
    $region7: #{tpu_custom_call.1} parent=1 // loop_footer_branch
      %33 = sbr.rel target = $region3
    $region8: #{tpu_custom_call.1} parent=1 // loop_exit
      _
    %2198 = vsyncpa [#allocation3], 1
    %s2199 = scalar_lea.sflag [#allocation3], 1
    %2200 = vsyncpa %s2199, 1
    %2201 = vsyncpa [#allocation6], 1
    %s2202 = scalar_lea.sflag [#allocation6], 1
    %2203 = vsyncpa %s2202, 1
    %2204 = vsyncpa [#allocation9], 1
    %s2205 = scalar_lea.sflag [#allocation9], 1
    %2206 = vsyncpa %s2205, 1
    %2207 = vsyncpa [#allocation12], 1
    %2208 = vsyncpa [#allocation15], 1
    %2209 = vsyncpa [#allocation4], 1
    %s2210 = scalar_lea.sflag [#allocation4], 1
    %2211 = vsyncpa %s2210, 1

</llo_original>
